<compile_context>
chip_gen: v5e
topology: v5e:2x2
jax: 0.10.0
libtpu: 0.0.40
codegen_flags: <defaults>
</compile_context>

<pallas_src>
import math

import jax
import jax.numpy as jnp
from jax.experimental import pallas as pl
from jax.experimental.pallas import tpu as pltpu


# ---------------- in-kernel math helpers (traced inside the Pallas kernel) -------------

def _sigmoid(x):
    # divide moved to the EUP via approximate reciprocal
    return pl.reciprocal(1.0 + jnp.exp(-x), approx=True)


def _gelu(x):
    # tanh-approximate GELU.
    # TODO(synk): PyTorch nn.GELU defaults to exact erf; the tanh approximation lowers
    # cleanly to the EUP and differs only by a small systematic epsilon.
    c = jnp.float32(0.7978845608028654)  # sqrt(2/pi)
    return 0.5 * x * (1.0 + jnp.tanh(c * (x + 0.044715 * x * x * x)))


def _layernorm(x, g, b, eps=1e-5):
    mu = jnp.mean(x, axis=-1, keepdims=True)
    var = jnp.mean((x - mu) ** 2, axis=-1, keepdims=True)
    return (x - mu) * jax.lax.rsqrt(var + eps) * g + b


def _softmax_last(x):
    m = jnp.max(x, axis=-1, keepdims=True)
    e = jnp.exp(x - m)
    return e * pl.reciprocal(jnp.sum(e, axis=-1, keepdims=True), approx=True)


def _softmax_and_log(x):
    # softmax + log-softmax without a full-width log(softmax(x)) round trip
    # (and without the log(0) -> -inf risk).
    m = jnp.max(x, axis=-1, keepdims=True)
    xs = x - m
    e = jnp.exp(xs)
    s = jnp.sum(e, axis=-1, keepdims=True)
    p = e * pl.reciprocal(s, approx=True)
    logp = xs - jnp.log(s)
    return p, logp


def _bdot(x, w_ref):
    # bf16 MXU matmul with f32 accumulation (elementwise math stays f32).
    return jnp.dot(x.astype(jnp.bfloat16), w_ref[...],
                   preferred_element_type=jnp.float32)


# ------------------------------- main fused kernel -------------------------------------
# grid = (B // Bt,): each grid step processes Bt batch elements, flattened to (Bt*S, D)
# rows for every row-wise matmul / elementwise stage; only the (S, S) attention is kept
# per batch element (batched einsum).  All packed weights are resident full blocks.

def _dual_kernel(scalars_ref, text_ref, image_ref,
                 w_t, w_im, w_d, w_ec2, w_o, w_si2, w_pp2, w_bid_t, w_bid_i,
                 bias_ref,
                 text_out, image_out, es_out, jsd_out):
    Bt, S, D = text_ref.shape
    R = Bt * S

    t = text_ref[...].astype(jnp.float32).reshape(R, D)
    im = image_ref[...].astype(jnp.float32).reshape(R, D)

    # packed biases / gains (rows of a single (14, D) f32 array)
    ec_b1, ec_g, ec_beta = bias_ref[0:1, :], bias_ref[1:2, :], bias_ref[2:3, :]
    ca_bq, ca_bk = bias_ref[3:4, :], bias_ref[4:5, :]
    ca_bv, ca_bo = bias_ref[5:6, :], bias_ref[6:7, :]
    si_b1, pp_b1 = bias_ref[7:8, :], bias_ref[8:9, :]
    pp_g, pp_beta, pp_b2 = bias_ref[9:10, :], bias_ref[10:11, :], bias_ref[11:12, :]
    bt_b, bi_b = bias_ref[12:13, :], bias_ref[13:14, :]
    temp, ec_b2, si_b2 = scalars_ref[0], scalars_ref[1], scalars_ref[2]

    # ---- fused stage-A matmuls: everything multiplied by text / image in one go
    at = _bdot(t, w_t)     # (R, 4D): [EmergenceCore | q (pre-scaled) | scale-int | param-pred]
    ai = _bdot(im, w_im)   # (R, 5D): [EmergenceCore | k | v | scale-int | param-pred]

    ec_h = at[:, 0:D] + ai[:, 0:D] + ec_b1
    q = at[:, D:2 * D] + ca_bq            # 1/sqrt(D) folded into w_q / ca_bq at pack time
    si_t = at[:, 2 * D:3 * D]
    pp_t = at[:, 3 * D:4 * D]
    k = ai[:, D:2 * D] + ca_bk
    v = ai[:, 2 * D:3 * D] + ca_bv
    si_i = ai[:, 3 * D:4 * D]
    pp_i = ai[:, 4 * D:5 * D]

    # ---- EmergenceCore over cat([text, image], -1)
    h = _gelu(_layernorm(ec_h, ec_g, ec_beta))
    emergence_state = _sigmoid(_bdot(h, w_ec2) + ec_b2)            # (R, 1)

    # ---- CrossModalAttention (single head; text queries, image keys/values)
    q3 = q.reshape(Bt, S, D).astype(jnp.bfloat16)
    k3 = k.reshape(Bt, S, D).astype(jnp.bfloat16)
    v3 = v.reshape(Bt, S, D).astype(jnp.bfloat16)
    scores = jnp.einsum("bsd,btd->bst", q3, k3, preferred_element_type=jnp.float32)
    probs = _softmax_last(scores)
    ctx = jnp.einsum("bst,btd->bsd", probs.astype(jnp.bfloat16), v3,
                     preferred_element_type=jnp.float32).reshape(R, D)
    attn_out = _bdot(ctx, w_o) + ca_bo                             # (R, D)

    # ---- CriticalDistributionEstimator (temperature clamp folded in at pack time)
    inv_scale = pl.reciprocal(temp * emergence_state, approx=True)
    distribution = _softmax_last(attn_out * inv_scale)             # (R, D)

    # ---- stage-B fused matmul: everything multiplied by the distribution
    ad = _bdot(distribution, w_d)                                  # (R, 2D)
    sh = ad[:, 0:D] + si_t + si_i + si_b1
    ph = ad[:, D:2 * D] + pp_t + pp_i + pp_b1

    # ScaleInteractionModule([distribution, current_params]) -> (R, 1) gate
    scale_weights = _sigmoid(_bdot(_gelu(sh), w_si2) + si_b2)

    # AdaptiveParameterOptimizer.param_predictor
    ph = _gelu(_layernorm(ph, pp_g, pp_beta))
    param_update = _bdot(ph, w_pp2) + pp_b2                        # (R, D)

    # TODO(synk): PyTorch source adds a (...,D) update to (...,2D) current_params, which
    # does not broadcast; resolved by applying the same gated update to both halves.
    upd = scale_weights * param_update
    text_params = t + upd
    image_params = im + upd

    # ---- BidirectionalEmergenceCore: both directions share one pair of (D, 2D) matmuls
    bid = _bdot(text_params, w_bid_t) + _bdot(image_params, w_bid_i)   # (R, 2D)
    text_emerged = jnp.tanh(bid[:, 0:D] + bt_b)
    image_emerged = jnp.tanh(bid[:, D:2 * D] + bi_b)

    # ---- SymmetricConsistencyLoss partial sum (batchmean divide happens outside)
    td, log_td = _softmax_and_log(text_emerged)
    idist, log_id = _softmax_and_log(image_emerged)
    mm = 0.5 * (td + idist)
    terms = mm * jnp.log(mm) - 0.5 * mm * (log_td + log_id)            # (R, D)
    part = jnp.sum(jnp.sum(terms, axis=-1, keepdims=True), axis=0, keepdims=True)  # (1, 1)

    text_out[...] = text_emerged.reshape(Bt, S, D).astype(text_out.dtype)
    image_out[...] = image_emerged.reshape(Bt, S, D).astype(image_out.dtype)
    # Module applies torch.sigmoid to the (already sigmoid) emergence_core output.
    es_out[...] = _sigmoid(emergence_state).reshape(Bt, S, 1).astype(es_out.dtype)
    jsd_out[0] = part.astype(jsd_out.dtype)


# ---------------------------------- parameters ------------------------------------------

def init_params(feature_dim, seed=42, temperature=0.1):
    D = feature_dim
    key = jax.random.PRNGKey(seed)

    def dense(k, fin, fout):
        return jax.random.normal(k, (fin, fout), jnp.float32) / jnp.sqrt(jnp.float32(fin))

    ks = jax.random.split(key, 12)
    zeros = lambda *s: jnp.zeros(s, jnp.float32)
    ones = lambda *s: jnp.ones(s, jnp.float32)
    return {
        # EmergenceCore: Linear(2D->D), LayerNorm(D), GELU, Linear(D->1), sigmoid
        "ec_w1": dense(ks[0], 2 * D, D), "ec_b1": zeros(1, D),
        "ec_g": ones(1, D), "ec_beta": zeros(1, D),
        "ec_w2": dense(ks[1], D, 1), "ec_b2": zeros(1, 1),
        # CrossModalAttention: q/k/v/o projections
        "ca_wq": dense(ks[2], D, D), "ca_bq": zeros(1, D),
        "ca_wk": dense(ks[3], D, D), "ca_bk": zeros(1, D),
        "ca_wv": dense(ks[4], D, D), "ca_bv": zeros(1, D),
        "ca_wo": dense(ks[5], D, D), "ca_bo": zeros(1, D),
        # CriticalDistributionEstimator.temperature
        "temp": jnp.full((1, 1), temperature, jnp.float32),
        # ScaleInteractionModule([D, 2D]): Linear(3D->D), GELU, Linear(D->1), sigmoid
        "si_w1": dense(ks[6], 3 * D, D), "si_b1": zeros(1, D),
        "si_w2": dense(ks[7], D, 1), "si_b2": zeros(1, 1),
        # AdaptiveParameterOptimizer.param_predictor: Linear(3D->D), LN, GELU, Linear(D->D)
        "pp_w1": dense(ks[8], 3 * D, D), "pp_b1": zeros(1, D),
        "pp_g": ones(1, D), "pp_beta": zeros(1, D),
        "pp_w2": dense(ks[9], D, D), "pp_b2": zeros(1, D),
        # BidirectionalEmergenceCore: Linear(2D->D)+tanh per direction
        "bt_w": dense(ks[10], 2 * D, D), "bt_b": zeros(1, D),
        "bi_w": dense(ks[11], 2 * D, D), "bi_b": zeros(1, D),
    }


def pack_params(p):
    """Pack raw parameters into the fused layout consumed by the Pallas kernel."""
    D = p["ec_w1"].shape[1]
    s = jnp.float32(1.0 / math.sqrt(D))          # attention scale folded into Wq / bq
    bf16 = lambda x: x.astype(jnp.bfloat16)
    cat1 = lambda xs: jnp.concatenate(xs, axis=1)
    return {
        # columns: [EmergenceCore(text) | Wq/sqrt(D) | ScaleInteraction(text) | ParamPred(text)]
        "w_t": bf16(cat1([p["ec_w1"][:D], p["ca_wq"] * s,
                          p["si_w1"][D:2 * D], p["pp_w1"][D:2 * D]])),
        # columns: [EmergenceCore(img) | Wk | Wv | ScaleInteraction(img) | ParamPred(img)]
        "w_im": bf16(cat1([p["ec_w1"][D:2 * D], p["ca_wk"], p["ca_wv"],
                           p["si_w1"][2 * D:3 * D], p["pp_w1"][2 * D:3 * D]])),
        # columns: [ScaleInteraction(dist) | ParamPred(dist)]
        "w_d": bf16(cat1([p["si_w1"][:D], p["pp_w1"][:D]])),
        "w_ec2": bf16(p["ec_w2"]),
        "w_o": bf16(p["ca_wo"]),
        "w_si2": bf16(p["si_w2"]),
        "w_pp2": bf16(p["pp_w2"]),
        # bidirectional core: text_params side / image_params side,
        # output columns: [text_emerged | image_emerged]
        "w_bid_t": bf16(cat1([p["bt_w"][:D], p["bi_w"][D:2 * D]])),
        "w_bid_i": bf16(cat1([p["bt_w"][D:2 * D], p["bi_w"][:D]])),
        # all (1, D) biases / gains in one array (row order documented in _dual_kernel)
        "biases": jnp.concatenate(
            [p["ec_b1"], p["ec_g"], p["ec_beta"],
             p["ca_bq"] * s, p["ca_bk"], p["ca_bv"], p["ca_bo"],
             p["si_b1"], p["pp_b1"], p["pp_g"], p["pp_beta"], p["pp_b2"],
             p["bt_b"], p["bi_b"]], axis=0).astype(jnp.float32),
        # SMEM scalars: [clamp(temperature, 0.001), ec_b2, si_b2, pad]
        "scalars": jnp.stack(
            [jnp.maximum(p["temp"][0, 0], jnp.float32(0.001)),
             p["ec_b2"][0, 0], p["si_b2"][0, 0], jnp.float32(0.0)]).astype(jnp.float32),
    }


_WEIGHT_NAMES = ("w_t", "w_im", "w_d", "w_ec2", "w_o", "w_si2", "w_pp2",
                 "w_bid_t", "w_bid_i", "biases")


# ---------------------------------- forward wrapper -------------------------------------

def _pick_block_b(batch, seq):
    """Batch elements per grid step: fill sublanes, but keep >=2 grid steps (megacore)."""
    cap = max(1, 256 // max(seq, 1))
    divisors = [d for d in range(1, batch + 1) if batch % d == 0 and d <= cap]
    multi = [d for d in divisors if batch // d >= 2]
    pool = multi if multi else (divisors if divisors else [1])
    return max(pool)


def _vmem_limit_bytes(weights, bt, seq, dim):
    wbytes = sum(int(w.size) * w.dtype.itemsize for w in weights)
    io_bytes = 4 * bt * seq * dim * 4            # 2 input + 2 output f32 blocks
    inter = 48 * bt * seq * dim * 4              # headroom for in-kernel intermediates
    est = 2 * (wbytes + io_bytes) + inter + (4 << 20)
    # TODO(synk): for very large feature dims, tile the contraction (K grid axis) instead
    # of holding all packed weights resident; 64 MiB is the v7x physical VMEM ceiling.
    return int(min(max(est, 32 << 20), 64 << 20))


@jax.jit
def _forward_train(packed, text_features, image_features):
    B, S, D = text_features.shape
    bt = _pick_block_b(B, S)
    nblk = B // bt
    weights = [packed[name] for name in _WEIGHT_NAMES]

    bsd_spec = pl.BlockSpec((bt, S, D), lambda i: (i, 0, 0))

    def full_spec(shape):
        nd = len(shape)
        return pl.BlockSpec(shape, lambda i, _nd=nd: (0,) * _nd)

    in_specs = ([pl.BlockSpec(memory_space=pltpu.MemorySpace.SMEM),   # scalars in SMEM
                 bsd_spec, bsd_spec]
                + [full_spec(w.shape) for w in weights])
    out_specs = (
        pl.BlockSpec((bt, S, D), lambda i: (i, 0, 0)),
        pl.BlockSpec((bt, S, D), lambda i: (i, 0, 0)),
        pl.BlockSpec((bt, S, 1), lambda i: (i, 0, 0)),
        pl.BlockSpec((1, 1, 1), lambda i: (i, 0, 0)),
    )
    out_shape = (
        jax.ShapeDtypeStruct((B, S, D), jnp.float32),
        jax.ShapeDtypeStruct((B, S, D), jnp.float32),
        jax.ShapeDtypeStruct((B, S, 1), jnp.float32),
        jax.ShapeDtypeStruct((nblk, 1, 1), jnp.float32),
    )
    main = pl.pallas_call(
        _dual_kernel,
        out_shape=out_shape,
        grid_spec=pltpu.PrefetchScalarGridSpec(
            num_scalar_prefetch=0, grid=(nblk,),
            in_specs=in_specs, out_specs=out_specs),
        compiler_params=pltpu.CompilerParams(
            dimension_semantics=("parallel",),           # batch blocks are independent
            vmem_limit_bytes=_vmem_limit_bytes(weights, bt, S, D)),
    )
    text_emerged, image_emerged, es_sig, jsd_parts = main(
        packed["scalars"], text_features, image_features, *weights)

    # Tiny cross-batch tail stays in XLA (fuses for free; no second pallas_call needed).
    consistency_loss = jnp.sum(jsd_parts) / jnp.float32(B)          # batchmean
    emergence_weighted_loss = consistency_loss * es_sig             # (B, S, 1)
    return text_emerged, image_emerged, emergence_weighted_loss, consistency_loss


class DualEmergenceOptimizer:
    """JAX/Pallas port of sden.dual.DualEmergenceOptimizer (training-mode forward)."""

    def __init__(self, dim, feature_dim, temperature=0.1, alpha=0.5,
                 consistency_threshold=0.05, patience=3, seed=42):
        self.is_training = True
        self.feature_dim = feature_dim
        self.alpha = alpha
        self.consistency_threshold = consistency_threshold
        self.patience = patience
        self.below_threshold_count = 0
        self.should_stop = False
        self.params = init_params(feature_dim, seed=seed, temperature=temperature)
        self.packed = pack_params(self.params)

    # host-side stateful early-stopping logic (no Pallas equivalent; plain Python)
    def check_consistency(self, loss_value):
        if loss_value < self.consistency_threshold:
            self.below_threshold_count += 1
            if self.below_threshold_count >= self.patience:
                self.should_stop = True
        else:
            self.below_threshold_count = 0
        return self.should_stop

    def __call__(self, text_features, image_features):
        te, ie, ewl, closs = _forward_train(self.packed, text_features, image_features)
        should_stop = self.check_consistency(float(closs))
        return te, ie, ewl, closs, should_stop


if __name__ == "__main__":
    B, S, D = 2, 8, 32
    key = jax.random.PRNGKey(0)
    kt, ki = jax.random.split(key)
    text = jax.random.normal(kt, (B, S, D), jnp.float32)
    image = jax.random.normal(ki, (B, S, D), jnp.float32)

    model = DualEmergenceOptimizer(dim=D, feature_dim=D)
    text_emerged, image_emerged, ewl, closs, should_stop = model(text, image)
    jax.block_until_ready((text_emerged, image_emerged, ewl, closs))

    assert text_emerged.shape == (B, S, D)
    assert image_emerged.shape == (B, S, D)
    assert ewl.shape == (B, S, 1)
    assert closs.shape == ()
    assert should_stop in (True, False)
    print("KERNEL_OK")
</pallas_src>

<mosaic_0001>
module attributes {stable_mosaic.version = 11 : i64} {
  func.func @_dual_kernel(%arg0: i32, %arg1: memref<4xf32, #tpu.memory_space<smem>>, %arg2: memref<1x8x32xf32, #tpu.memory_space<vmem>>, %arg3: memref<1x8x32xf32, #tpu.memory_space<vmem>>, %arg4: memref<32x128xbf16, #tpu.memory_space<vmem>>, %arg5: memref<32x160xbf16, #tpu.memory_space<vmem>>, %arg6: memref<32x64xbf16, #tpu.memory_space<vmem>>, %arg7: memref<32x1xbf16, #tpu.memory_space<vmem>>, %arg8: memref<32x32xbf16, #tpu.memory_space<vmem>>, %arg9: memref<32x1xbf16, #tpu.memory_space<vmem>>, %arg10: memref<32x32xbf16, #tpu.memory_space<vmem>>, %arg11: memref<32x64xbf16, #tpu.memory_space<vmem>>, %arg12: memref<32x64xbf16, #tpu.memory_space<vmem>>, %arg13: memref<14x32xf32, #tpu.memory_space<vmem>>, %arg14: memref<1x8x32xf32, #tpu.memory_space<vmem>>, %arg15: memref<1x8x32xf32, #tpu.memory_space<vmem>>, %arg16: memref<1x8x1xf32, #tpu.memory_space<vmem>>, %arg17: memref<1x1x1xf32, #tpu.memory_space<vmem>>) attributes {dimension_semantics = [#tpu.dimension_semantics<parallel>], iteration_bounds = array<i64: 2>, scalar_prefetch = 0 : i64, scratch_operands = 0 : i64, tpu.core_type = #tpu.core_type<tc>, window_params = [{transform_indices = @transform_0, window_bounds = array<i64: 4>}, {transform_indices = @transform_1, window_bounds = array<i64: 1, 8, 32>}, {transform_indices = @transform_2, window_bounds = array<i64: 1, 8, 32>}, {pipeline_mode = #tpu.pipeline_mode<synchronous>, transform_indices = @transform_3, window_bounds = array<i64: 32, 128>}, {pipeline_mode = #tpu.pipeline_mode<synchronous>, transform_indices = @transform_4, window_bounds = array<i64: 32, 160>}, {pipeline_mode = #tpu.pipeline_mode<synchronous>, transform_indices = @transform_5, window_bounds = array<i64: 32, 64>}, {pipeline_mode = #tpu.pipeline_mode<synchronous>, transform_indices = @transform_6, window_bounds = array<i64: 32, 1>}, {pipeline_mode = #tpu.pipeline_mode<synchronous>, transform_indices = @transform_7, window_bounds = array<i64: 32, 32>}, {pipeline_mode = #tpu.pipeline_mode<synchronous>, transform_indices = @transform_8, window_bounds = array<i64: 32, 1>}, {pipeline_mode = #tpu.pipeline_mode<synchronous>, transform_indices = @transform_9, window_bounds = array<i64: 32, 32>}, {pipeline_mode = #tpu.pipeline_mode<synchronous>, transform_indices = @transform_10, window_bounds = array<i64: 32, 64>}, {pipeline_mode = #tpu.pipeline_mode<synchronous>, transform_indices = @transform_11, window_bounds = array<i64: 32, 64>}, {pipeline_mode = #tpu.pipeline_mode<synchronous>, transform_indices = @transform_12, window_bounds = array<i64: 14, 32>}, {transform_indices = @transform_13, window_bounds = array<i64: 1, 8, 32>}, {transform_indices = @transform_14, window_bounds = array<i64: 1, 8, 32>}, {transform_indices = @transform_15, window_bounds = array<i64: 1, 8, 1>}, {transform_indices = @transform_16, window_bounds = array<i64: 1, 1, 1>}]} {
    %c0 = arith.constant 0 : index
    %c0_0 = arith.constant 0 : index
    %c0_1 = arith.constant 0 : index
    %0 = vector.load %arg2[%c0, %c0_0, %c0_1] : memref<1x8x32xf32, #tpu.memory_space<vmem>>, vector<1x8x32xf32>
    %1 = vector.shape_cast %0 : vector<1x8x32xf32> to vector<8x32xf32>
    %c0_2 = arith.constant 0 : index
    %c0_3 = arith.constant 0 : index
    %c0_4 = arith.constant 0 : index
    %2 = vector.load %arg3[%c0_2, %c0_3, %c0_4] : memref<1x8x32xf32, #tpu.memory_space<vmem>>, vector<1x8x32xf32>
    %3 = vector.shape_cast %2 : vector<1x8x32xf32> to vector<8x32xf32>
    %c0_5 = arith.constant 0 : index
    %c0_6 = arith.constant 0 : index
    %4 = vector.load %arg13[%c0_5, %c0_6] : memref<14x32xf32, #tpu.memory_space<vmem>>, vector<1x32xf32>
    %c1 = arith.constant 1 : index
    %c0_7 = arith.constant 0 : index
    %5 = vector.load %arg13[%c1, %c0_7] : memref<14x32xf32, #tpu.memory_space<vmem>>, vector<1x32xf32>
    %c2 = arith.constant 2 : index
    %c0_8 = arith.constant 0 : index
    %6 = vector.load %arg13[%c2, %c0_8] : memref<14x32xf32, #tpu.memory_space<vmem>>, vector<1x32xf32>
    %c3 = arith.constant 3 : index
    %c0_9 = arith.constant 0 : index
    %7 = vector.load %arg13[%c3, %c0_9] : memref<14x32xf32, #tpu.memory_space<vmem>>, vector<1x32xf32>
    %c4 = arith.constant 4 : index
    %c0_10 = arith.constant 0 : index
    %8 = vector.load %arg13[%c4, %c0_10] : memref<14x32xf32, #tpu.memory_space<vmem>>, vector<1x32xf32>
    %c5 = arith.constant 5 : index
    %c0_11 = arith.constant 0 : index
    %9 = vector.load %arg13[%c5, %c0_11] : memref<14x32xf32, #tpu.memory_space<vmem>>, vector<1x32xf32>
    %c6 = arith.constant 6 : index
    %c0_12 = arith.constant 0 : index
    %10 = vector.load %arg13[%c6, %c0_12] : memref<14x32xf32, #tpu.memory_space<vmem>>, vector<1x32xf32>
    %c7 = arith.constant 7 : index
    %c0_13 = arith.constant 0 : index
    %11 = vector.load %arg13[%c7, %c0_13] : memref<14x32xf32, #tpu.memory_space<vmem>>, vector<1x32xf32>
    %c8 = arith.constant 8 : index
    %c0_14 = arith.constant 0 : index
    %12 = vector.load %arg13[%c8, %c0_14] : memref<14x32xf32, #tpu.memory_space<vmem>>, vector<1x32xf32>
    %c9 = arith.constant 9 : index
    %c0_15 = arith.constant 0 : index
    %13 = vector.load %arg13[%c9, %c0_15] : memref<14x32xf32, #tpu.memory_space<vmem>>, vector<1x32xf32>
    %c10 = arith.constant 10 : index
    %c0_16 = arith.constant 0 : index
    %14 = vector.load %arg13[%c10, %c0_16] : memref<14x32xf32, #tpu.memory_space<vmem>>, vector<1x32xf32>
    %c11 = arith.constant 11 : index
    %c0_17 = arith.constant 0 : index
    %15 = vector.load %arg13[%c11, %c0_17] : memref<14x32xf32, #tpu.memory_space<vmem>>, vector<1x32xf32>
    %c12 = arith.constant 12 : index
    %c0_18 = arith.constant 0 : index
    %16 = vector.load %arg13[%c12, %c0_18] : memref<14x32xf32, #tpu.memory_space<vmem>>, vector<1x32xf32>
    %c13 = arith.constant 13 : index
    %c0_19 = arith.constant 0 : index
    %17 = vector.load %arg13[%c13, %c0_19] : memref<14x32xf32, #tpu.memory_space<vmem>>, vector<1x32xf32>
    %c0_20 = arith.constant 0 : index
    %18 = memref.load %arg1[%c0_20] : memref<4xf32, #tpu.memory_space<smem>>
    %c1_21 = arith.constant 1 : index
    %19 = memref.load %arg1[%c1_21] : memref<4xf32, #tpu.memory_space<smem>>
    %c2_22 = arith.constant 2 : index
    %20 = memref.load %arg1[%c2_22] : memref<4xf32, #tpu.memory_space<smem>>
    %21 = arith.truncf %1 : vector<8x32xf32> to vector<8x32xbf16>
    %c0_23 = arith.constant 0 : index
    %c0_24 = arith.constant 0 : index
    %22 = vector.load %arg4[%c0_23, %c0_24] : memref<32x128xbf16, #tpu.memory_space<vmem>>, vector<32x128xbf16>
    %cst = arith.constant dense<0.000000e+00> : vector<8x128xf32>
    %23 = tpu.matmul %21, %22, %cst {dimension_numbers = #tpu.dot_dimension_numbers<[1], [0], [0], [1], [0, 0, 1, 1], [], []>} : vector<8x32xbf16>, vector<32x128xbf16>, vector<8x128xf32> -> vector<8x128xf32>
    %24 = arith.truncf %3 : vector<8x32xf32> to vector<8x32xbf16>
    %c0_25 = arith.constant 0 : index
    %c0_26 = arith.constant 0 : index
    %25 = vector.load %arg5[%c0_25, %c0_26] : memref<32x160xbf16, #tpu.memory_space<vmem>>, vector<32x160xbf16>
    %cst_27 = arith.constant dense<0.000000e+00> : vector<8x160xf32>
    %26 = tpu.matmul %24, %25, %cst_27 {dimension_numbers = #tpu.dot_dimension_numbers<[1], [0], [0], [1], [0, 0, 1, 1], [], []>} : vector<8x32xbf16>, vector<32x160xbf16>, vector<8x160xf32> -> vector<8x160xf32>
    %27 = vector.extract_strided_slice %23 {offsets = [0, 0], sizes = [8, 32], strides = [1, 1]} : vector<8x128xf32> to vector<8x32xf32>
    %28 = vector.extract_strided_slice %26 {offsets = [0, 0], sizes = [8, 32], strides = [1, 1]} : vector<8x160xf32> to vector<8x32xf32>
    %29 = arith.addf %27, %28 : vector<8x32xf32>
    %30 = vector.broadcast %4 : vector<1x32xf32> to vector<8x32xf32>
    %31 = arith.addf %29, %30 : vector<8x32xf32>
    %32 = vector.extract_strided_slice %23 {offsets = [0, 32], sizes = [8, 32], strides = [1, 1]} : vector<8x128xf32> to vector<8x32xf32>
    %33 = vector.broadcast %7 : vector<1x32xf32> to vector<8x32xf32>
    %34 = arith.addf %32, %33 : vector<8x32xf32>
    %35 = vector.extract_strided_slice %23 {offsets = [0, 64], sizes = [8, 32], strides = [1, 1]} : vector<8x128xf32> to vector<8x32xf32>
    %36 = vector.extract_strided_slice %23 {offsets = [0, 96], sizes = [8, 32], strides = [1, 1]} : vector<8x128xf32> to vector<8x32xf32>
    %37 = vector.extract_strided_slice %26 {offsets = [0, 32], sizes = [8, 32], strides = [1, 1]} : vector<8x160xf32> to vector<8x32xf32>
    %38 = vector.broadcast %8 : vector<1x32xf32> to vector<8x32xf32>
    %39 = arith.addf %37, %38 : vector<8x32xf32>
    %40 = vector.extract_strided_slice %26 {offsets = [0, 64], sizes = [8, 32], strides = [1, 1]} : vector<8x160xf32> to vector<8x32xf32>
    %41 = vector.broadcast %9 : vector<1x32xf32> to vector<8x32xf32>
    %42 = arith.addf %40, %41 : vector<8x32xf32>
    %43 = vector.extract_strided_slice %26 {offsets = [0, 96], sizes = [8, 32], strides = [1, 1]} : vector<8x160xf32> to vector<8x32xf32>
    %44 = vector.extract_strided_slice %26 {offsets = [0, 128], sizes = [8, 32], strides = [1, 1]} : vector<8x160xf32> to vector<8x32xf32>
    %cst_28 = arith.constant dense<0.000000e+00> : vector<8xf32>
    %45 = vector.multi_reduction <add>, %31, %cst_28 [1] : vector<8x32xf32> to vector<8xf32>
    %46 = vector.shape_cast %45 : vector<8xf32> to vector<8x1xf32>
    %cst_29 = arith.constant 3.200000e+01 : f32
    %47 = vector.broadcast %cst_29 : f32 to vector<8x1xf32>
    %48 = arith.divf %46, %47 : vector<8x1xf32>
    %49 = vector.broadcast %48 : vector<8x1xf32> to vector<8x32xf32>
    %50 = arith.subf %31, %49 : vector<8x32xf32>
    %51 = arith.mulf %50, %50 : vector<8x32xf32>
    %cst_30 = arith.constant dense<0.000000e+00> : vector<8xf32>
    %52 = vector.multi_reduction <add>, %51, %cst_30 [1] : vector<8x32xf32> to vector<8xf32>
    %53 = vector.shape_cast %52 : vector<8xf32> to vector<8x1xf32>
    %cst_31 = arith.constant 3.200000e+01 : f32
    %54 = vector.broadcast %cst_31 : f32 to vector<8x1xf32>
    %55 = arith.divf %53, %54 : vector<8x1xf32>
    %56 = vector.broadcast %48 : vector<8x1xf32> to vector<8x32xf32>
    %57 = arith.subf %31, %56 : vector<8x32xf32>
    %cst_32 = arith.constant 9.99999974E-6 : f32
    %58 = vector.broadcast %cst_32 : f32 to vector<8x1xf32>
    %59 = arith.addf %55, %58 : vector<8x1xf32>
    %60 = math.rsqrt %59 : vector<8x1xf32>
    %61 = vector.broadcast %60 : vector<8x1xf32> to vector<8x32xf32>
    %62 = arith.mulf %57, %61 : vector<8x32xf32>
    %63 = vector.broadcast %5 : vector<1x32xf32> to vector<8x32xf32>
    %64 = arith.mulf %62, %63 : vector<8x32xf32>
    %65 = vector.broadcast %6 : vector<1x32xf32> to vector<8x32xf32>
    %66 = arith.addf %64, %65 : vector<8x32xf32>
    %cst_33 = arith.constant 5.000000e-01 : f32
    %67 = vector.broadcast %cst_33 : f32 to vector<8x32xf32>
    %68 = arith.mulf %67, %66 : vector<8x32xf32>
    %cst_34 = arith.constant 4.471500e-02 : f32
    %69 = vector.broadcast %cst_34 : f32 to vector<8x32xf32>
    %70 = arith.mulf %69, %66 : vector<8x32xf32>
    %71 = arith.mulf %70, %66 : vector<8x32xf32>
    %72 = arith.mulf %71, %66 : vector<8x32xf32>
    %73 = arith.addf %66, %72 : vector<8x32xf32>
    %cst_35 = arith.constant 0.797884583 : f32
    %74 = vector.broadcast %cst_35 : f32 to vector<8x32xf32>
    %75 = arith.mulf %74, %73 : vector<8x32xf32>
    %76 = math.tanh %75 : vector<8x32xf32>
    %cst_36 = arith.constant 1.000000e+00 : f32
    %77 = vector.broadcast %cst_36 : f32 to vector<8x32xf32>
    %78 = arith.addf %77, %76 : vector<8x32xf32>
    %79 = arith.mulf %68, %78 : vector<8x32xf32>
    %80 = arith.truncf %79 : vector<8x32xf32> to vector<8x32xbf16>
    %c0_37 = arith.constant 0 : index
    %c0_38 = arith.constant 0 : index
    %81 = vector.load %arg7[%c0_37, %c0_38] : memref<32x1xbf16, #tpu.memory_space<vmem>>, vector<32x1xbf16>
    %cst_39 = arith.constant dense<0.000000e+00> : vector<8x1xf32>
    %82 = tpu.matmul %80, %81, %cst_39 {dimension_numbers = #tpu.dot_dimension_numbers<[1], [0], [0], [1], [0, 0, 1, 1], [], []>} : vector<8x32xbf16>, vector<32x1xbf16>, vector<8x1xf32> -> vector<8x1xf32>
    %83 = vector.broadcast %19 : f32 to vector<8x1xf32>
    %84 = arith.addf %82, %83 : vector<8x1xf32>
    %cst_40 = arith.constant 0.000000e+00 : f32
    %85 = vector.broadcast %cst_40 : f32 to vector<8x1xf32>
    %86 = arith.subf %85, %84 : vector<8x1xf32>
    %87 = math.exp %86 : vector<8x1xf32>
    %cst_41 = arith.constant 1.000000e+00 : f32
    %88 = vector.broadcast %cst_41 : f32 to vector<8x1xf32>
    %89 = arith.addf %88, %87 : vector<8x1xf32>
    %90 = tpu.reciprocal %89 {approx = true} : vector<8x1xf32> -> vector<8x1xf32>
    %91 = vector.shape_cast %34 : vector<8x32xf32> to vector<1x8x32xf32>
    %92 = arith.truncf %91 : vector<1x8x32xf32> to vector<1x8x32xbf16>
    %93 = vector.shape_cast %39 : vector<8x32xf32> to vector<1x8x32xf32>
    %94 = arith.truncf %93 : vector<1x8x32xf32> to vector<1x8x32xbf16>
    %95 = vector.shape_cast %42 : vector<8x32xf32> to vector<1x8x32xf32>
    %96 = arith.truncf %95 : vector<1x8x32xf32> to vector<1x8x32xbf16>
    "tpu.trace_start"() <{level = 10 : i32, message = "bsd,btd->bst"}> : () -> ()
    %cst_42 = arith.constant dense<0.000000e+00> : vector<1x8x8xf32>
    %97 = tpu.matmul %92, %94, %cst_42 {dimension_numbers = #tpu.dot_dimension_numbers<[2], [2], [1], [1], [0, 0, 0, 1, 1, 1], [0], [0]>} : vector<1x8x32xbf16>, vector<1x8x32xbf16>, vector<1x8x8xf32> -> vector<1x8x8xf32>
    "tpu.trace_stop"() : () -> ()
    %cst_43 = arith.constant dense<0xFF800000> : vector<1x8xf32>
    %98 = vector.multi_reduction <maximumf>, %97, %cst_43 [2] : vector<1x8x8xf32> to vector<1x8xf32>
    %99 = vector.shape_cast %98 : vector<1x8xf32> to vector<1x8x1xf32>
    %100 = vector.broadcast %99 : vector<1x8x1xf32> to vector<1x8x8xf32>
    %101 = arith.subf %97, %100 : vector<1x8x8xf32>
    %102 = math.exp %101 : vector<1x8x8xf32>
    %cst_44 = arith.constant dense<0.000000e+00> : vector<1x8xf32>
    %103 = vector.multi_reduction <add>, %102, %cst_44 [2] : vector<1x8x8xf32> to vector<1x8xf32>
    %104 = vector.shape_cast %103 : vector<1x8xf32> to vector<1x8x1xf32>
    %105 = tpu.reciprocal %104 {approx = true} : vector<1x8x1xf32> -> vector<1x8x1xf32>
    %106 = vector.broadcast %105 : vector<1x8x1xf32> to vector<1x8x8xf32>
    %107 = arith.mulf %102, %106 : vector<1x8x8xf32>
    %108 = arith.truncf %107 : vector<1x8x8xf32> to vector<1x8x8xbf16>
    "tpu.trace_start"() <{level = 10 : i32, message = "bst,btd->bsd"}> : () -> ()
    %cst_45 = arith.constant dense<0.000000e+00> : vector<1x8x32xf32>
    %109 = tpu.matmul %108, %96, %cst_45 {dimension_numbers = #tpu.dot_dimension_numbers<[2], [1], [1], [2], [0, 0, 0, 1, 1, 2], [0], [0]>} : vector<1x8x8xbf16>, vector<1x8x32xbf16>, vector<1x8x32xf32> -> vector<1x8x32xf32>
    "tpu.trace_stop"() : () -> ()
    %110 = vector.shape_cast %109 : vector<1x8x32xf32> to vector<8x32xf32>
    %111 = arith.truncf %110 : vector<8x32xf32> to vector<8x32xbf16>
    %c0_46 = arith.constant 0 : index
    %c0_47 = arith.constant 0 : index
    %112 = vector.load %arg8[%c0_46, %c0_47] : memref<32x32xbf16, #tpu.memory_space<vmem>>, vector<32x32xbf16>
    %cst_48 = arith.constant dense<0.000000e+00> : vector<8x32xf32>
    %113 = tpu.matmul %111, %112, %cst_48 {dimension_numbers = #tpu.dot_dimension_numbers<[1], [0], [0], [1], [0, 0, 1, 1], [], []>} : vector<8x32xbf16>, vector<32x32xbf16>, vector<8x32xf32> -> vector<8x32xf32>
    %114 = vector.broadcast %10 : vector<1x32xf32> to vector<8x32xf32>
    %115 = arith.addf %113, %114 : vector<8x32xf32>
    %116 = vector.broadcast %18 : f32 to vector<8x1xf32>
    %117 = arith.mulf %116, %90 : vector<8x1xf32>
    %118 = tpu.reciprocal %117 {approx = true} : vector<8x1xf32> -> vector<8x1xf32>
    %119 = vector.broadcast %118 : vector<8x1xf32> to vector<8x32xf32>
    %120 = arith.mulf %115, %119 : vector<8x32xf32>
    %cst_49 = arith.constant dense<0xFF800000> : vector<8xf32>
    %121 = vector.multi_reduction <maximumf>, %120, %cst_49 [1] : vector<8x32xf32> to vector<8xf32>
    %122 = vector.shape_cast %121 : vector<8xf32> to vector<8x1xf32>
    %123 = vector.broadcast %122 : vector<8x1xf32> to vector<8x32xf32>
    %124 = arith.subf %120, %123 : vector<8x32xf32>
    %125 = math.exp %124 : vector<8x32xf32>
    %cst_50 = arith.constant dense<0.000000e+00> : vector<8xf32>
    %126 = vector.multi_reduction <add>, %125, %cst_50 [1] : vector<8x32xf32> to vector<8xf32>
    %127 = vector.shape_cast %126 : vector<8xf32> to vector<8x1xf32>
    %128 = tpu.reciprocal %127 {approx = true} : vector<8x1xf32> -> vector<8x1xf32>
    %129 = vector.broadcast %128 : vector<8x1xf32> to vector<8x32xf32>
    %130 = arith.mulf %125, %129 : vector<8x32xf32>
    %131 = arith.truncf %130 : vector<8x32xf32> to vector<8x32xbf16>
    %c0_51 = arith.constant 0 : index
    %c0_52 = arith.constant 0 : index
    %132 = vector.load %arg6[%c0_51, %c0_52] : memref<32x64xbf16, #tpu.memory_space<vmem>>, vector<32x64xbf16>
    %cst_53 = arith.constant dense<0.000000e+00> : vector<8x64xf32>
    %133 = tpu.matmul %131, %132, %cst_53 {dimension_numbers = #tpu.dot_dimension_numbers<[1], [0], [0], [1], [0, 0, 1, 1], [], []>} : vector<8x32xbf16>, vector<32x64xbf16>, vector<8x64xf32> -> vector<8x64xf32>
    %134 = vector.extract_strided_slice %133 {offsets = [0, 0], sizes = [8, 32], strides = [1, 1]} : vector<8x64xf32> to vector<8x32xf32>
    %135 = arith.addf %134, %35 : vector<8x32xf32>
    %136 = arith.addf %135, %43 : vector<8x32xf32>
    %137 = vector.broadcast %11 : vector<1x32xf32> to vector<8x32xf32>
    %138 = arith.addf %136, %137 : vector<8x32xf32>
    %139 = vector.extract_strided_slice %133 {offsets = [0, 32], sizes = [8, 32], strides = [1, 1]} : vector<8x64xf32> to vector<8x32xf32>
    %140 = arith.addf %139, %36 : vector<8x32xf32>
    %141 = arith.addf %140, %44 : vector<8x32xf32>
    %142 = vector.broadcast %12 : vector<1x32xf32> to vector<8x32xf32>
    %143 = arith.addf %141, %142 : vector<8x32xf32>
    %cst_54 = arith.constant 5.000000e-01 : f32
    %144 = vector.broadcast %cst_54 : f32 to vector<8x32xf32>
    %145 = arith.mulf %144, %138 : vector<8x32xf32>
    %cst_55 = arith.constant 4.471500e-02 : f32
    %146 = vector.broadcast %cst_55 : f32 to vector<8x32xf32>
    %147 = arith.mulf %146, %138 : vector<8x32xf32>
    %148 = arith.mulf %147, %138 : vector<8x32xf32>
    %149 = arith.mulf %148, %138 : vector<8x32xf32>
    %150 = arith.addf %138, %149 : vector<8x32xf32>
    %cst_56 = arith.constant 0.797884583 : f32
    %151 = vector.broadcast %cst_56 : f32 to vector<8x32xf32>
    %152 = arith.mulf %151, %150 : vector<8x32xf32>
    %153 = math.tanh %152 : vector<8x32xf32>
    %cst_57 = arith.constant 1.000000e+00 : f32
    %154 = vector.broadcast %cst_57 : f32 to vector<8x32xf32>
    %155 = arith.addf %154, %153 : vector<8x32xf32>
    %156 = arith.mulf %145, %155 : vector<8x32xf32>
    %157 = arith.truncf %156 : vector<8x32xf32> to vector<8x32xbf16>
    %c0_58 = arith.constant 0 : index
    %c0_59 = arith.constant 0 : index
    %158 = vector.load %arg9[%c0_58, %c0_59] : memref<32x1xbf16, #tpu.memory_space<vmem>>, vector<32x1xbf16>
    %cst_60 = arith.constant dense<0.000000e+00> : vector<8x1xf32>
    %159 = tpu.matmul %157, %158, %cst_60 {dimension_numbers = #tpu.dot_dimension_numbers<[1], [0], [0], [1], [0, 0, 1, 1], [], []>} : vector<8x32xbf16>, vector<32x1xbf16>, vector<8x1xf32> -> vector<8x1xf32>
    %160 = vector.broadcast %20 : f32 to vector<8x1xf32>
    %161 = arith.addf %159, %160 : vector<8x1xf32>
    %cst_61 = arith.constant 0.000000e+00 : f32
    %162 = vector.broadcast %cst_61 : f32 to vector<8x1xf32>
    %163 = arith.subf %162, %161 : vector<8x1xf32>
    %164 = math.exp %163 : vector<8x1xf32>
    %cst_62 = arith.constant 1.000000e+00 : f32
    %165 = vector.broadcast %cst_62 : f32 to vector<8x1xf32>
    %166 = arith.addf %165, %164 : vector<8x1xf32>
    %167 = tpu.reciprocal %166 {approx = true} : vector<8x1xf32> -> vector<8x1xf32>
    %cst_63 = arith.constant dense<0.000000e+00> : vector<8xf32>
    %168 = vector.multi_reduction <add>, %143, %cst_63 [1] : vector<8x32xf32> to vector<8xf32>
    %169 = vector.shape_cast %168 : vector<8xf32> to vector<8x1xf32>
    %cst_64 = arith.constant 3.200000e+01 : f32
    %170 = vector.broadcast %cst_64 : f32 to vector<8x1xf32>
    %171 = arith.divf %169, %170 : vector<8x1xf32>
    %172 = vector.broadcast %171 : vector<8x1xf32> to vector<8x32xf32>
    %173 = arith.subf %143, %172 : vector<8x32xf32>
    %174 = arith.mulf %173, %173 : vector<8x32xf32>
    %cst_65 = arith.constant dense<0.000000e+00> : vector<8xf32>
    %175 = vector.multi_reduction <add>, %174, %cst_65 [1] : vector<8x32xf32> to vector<8xf32>
    %176 = vector.shape_cast %175 : vector<8xf32> to vector<8x1xf32>
    %cst_66 = arith.constant 3.200000e+01 : f32
    %177 = vector.broadcast %cst_66 : f32 to vector<8x1xf32>
    %178 = arith.divf %176, %177 : vector<8x1xf32>
    %179 = vector.broadcast %171 : vector<8x1xf32> to vector<8x32xf32>
    %180 = arith.subf %143, %179 : vector<8x32xf32>
    %cst_67 = arith.constant 9.99999974E-6 : f32
    %181 = vector.broadcast %cst_67 : f32 to vector<8x1xf32>
    %182 = arith.addf %178, %181 : vector<8x1xf32>
    %183 = math.rsqrt %182 : vector<8x1xf32>
    %184 = vector.broadcast %183 : vector<8x1xf32> to vector<8x32xf32>
    %185 = arith.mulf %180, %184 : vector<8x32xf32>
    %186 = vector.broadcast %13 : vector<1x32xf32> to vector<8x32xf32>
    %187 = arith.mulf %185, %186 : vector<8x32xf32>
    %188 = vector.broadcast %14 : vector<1x32xf32> to vector<8x32xf32>
    %189 = arith.addf %187, %188 : vector<8x32xf32>
    %cst_68 = arith.constant 5.000000e-01 : f32
    %190 = vector.broadcast %cst_68 : f32 to vector<8x32xf32>
    %191 = arith.mulf %190, %189 : vector<8x32xf32>
    %cst_69 = arith.constant 4.471500e-02 : f32
    %192 = vector.broadcast %cst_69 : f32 to vector<8x32xf32>
    %193 = arith.mulf %192, %189 : vector<8x32xf32>
    %194 = arith.mulf %193, %189 : vector<8x32xf32>
    %195 = arith.mulf %194, %189 : vector<8x32xf32>
    %196 = arith.addf %189, %195 : vector<8x32xf32>
    %cst_70 = arith.constant 0.797884583 : f32
    %197 = vector.broadcast %cst_70 : f32 to vector<8x32xf32>
    %198 = arith.mulf %197, %196 : vector<8x32xf32>
    %199 = math.tanh %198 : vector<8x32xf32>
    %cst_71 = arith.constant 1.000000e+00 : f32
    %200 = vector.broadcast %cst_71 : f32 to vector<8x32xf32>
    %201 = arith.addf %200, %199 : vector<8x32xf32>
    %202 = arith.mulf %191, %201 : vector<8x32xf32>
    %203 = arith.truncf %202 : vector<8x32xf32> to vector<8x32xbf16>
    %c0_72 = arith.constant 0 : index
    %c0_73 = arith.constant 0 : index
    %204 = vector.load %arg10[%c0_72, %c0_73] : memref<32x32xbf16, #tpu.memory_space<vmem>>, vector<32x32xbf16>
    %cst_74 = arith.constant dense<0.000000e+00> : vector<8x32xf32>
    %205 = tpu.matmul %203, %204, %cst_74 {dimension_numbers = #tpu.dot_dimension_numbers<[1], [0], [0], [1], [0, 0, 1, 1], [], []>} : vector<8x32xbf16>, vector<32x32xbf16>, vector<8x32xf32> -> vector<8x32xf32>
    %206 = vector.broadcast %15 : vector<1x32xf32> to vector<8x32xf32>
    %207 = arith.addf %205, %206 : vector<8x32xf32>
    %208 = vector.broadcast %167 : vector<8x1xf32> to vector<8x32xf32>
    %209 = arith.mulf %208, %207 : vector<8x32xf32>
    %210 = arith.addf %1, %209 : vector<8x32xf32>
    %211 = arith.addf %3, %209 : vector<8x32xf32>
    %212 = arith.truncf %210 : vector<8x32xf32> to vector<8x32xbf16>
    %c0_75 = arith.constant 0 : index
    %c0_76 = arith.constant 0 : index
    %213 = vector.load %arg11[%c0_75, %c0_76] : memref<32x64xbf16, #tpu.memory_space<vmem>>, vector<32x64xbf16>
    %cst_77 = arith.constant dense<0.000000e+00> : vector<8x64xf32>
    %214 = tpu.matmul %212, %213, %cst_77 {dimension_numbers = #tpu.dot_dimension_numbers<[1], [0], [0], [1], [0, 0, 1, 1], [], []>} : vector<8x32xbf16>, vector<32x64xbf16>, vector<8x64xf32> -> vector<8x64xf32>
    %215 = arith.truncf %211 : vector<8x32xf32> to vector<8x32xbf16>
    %c0_78 = arith.constant 0 : index
    %c0_79 = arith.constant 0 : index
    %216 = vector.load %arg12[%c0_78, %c0_79] : memref<32x64xbf16, #tpu.memory_space<vmem>>, vector<32x64xbf16>
    %cst_80 = arith.constant dense<0.000000e+00> : vector<8x64xf32>
    %217 = tpu.matmul %215, %216, %cst_80 {dimension_numbers = #tpu.dot_dimension_numbers<[1], [0], [0], [1], [0, 0, 1, 1], [], []>} : vector<8x32xbf16>, vector<32x64xbf16>, vector<8x64xf32> -> vector<8x64xf32>
    %218 = arith.addf %214, %217 : vector<8x64xf32>
    %219 = vector.extract_strided_slice %218 {offsets = [0, 0], sizes = [8, 32], strides = [1, 1]} : vector<8x64xf32> to vector<8x32xf32>
    %220 = vector.broadcast %16 : vector<1x32xf32> to vector<8x32xf32>
    %221 = arith.addf %219, %220 : vector<8x32xf32>
    %222 = math.tanh %221 : vector<8x32xf32>
    %223 = vector.extract_strided_slice %218 {offsets = [0, 32], sizes = [8, 32], strides = [1, 1]} : vector<8x64xf32> to vector<8x32xf32>
    %224 = vector.broadcast %17 : vector<1x32xf32> to vector<8x32xf32>
    %225 = arith.addf %223, %224 : vector<8x32xf32>
    %226 = math.tanh %225 : vector<8x32xf32>
    %cst_81 = arith.constant dense<0xFF800000> : vector<8xf32>
    %227 = vector.multi_reduction <maximumf>, %222, %cst_81 [1] : vector<8x32xf32> to vector<8xf32>
    %228 = vector.shape_cast %227 : vector<8xf32> to vector<8x1xf32>
    %229 = vector.broadcast %228 : vector<8x1xf32> to vector<8x32xf32>
    %230 = arith.subf %222, %229 : vector<8x32xf32>
    %231 = math.exp %230 : vector<8x32xf32>
    %cst_82 = arith.constant dense<0.000000e+00> : vector<8xf32>
    %232 = vector.multi_reduction <add>, %231, %cst_82 [1] : vector<8x32xf32> to vector<8xf32>
    %233 = vector.shape_cast %232 : vector<8xf32> to vector<8x1xf32>
    %234 = tpu.reciprocal %233 {approx = true} : vector<8x1xf32> -> vector<8x1xf32>
    %235 = vector.broadcast %234 : vector<8x1xf32> to vector<8x32xf32>
    %236 = arith.mulf %231, %235 : vector<8x32xf32>
    %237 = math.log %233 : vector<8x1xf32>
    %238 = vector.broadcast %237 : vector<8x1xf32> to vector<8x32xf32>
    %239 = arith.subf %230, %238 : vector<8x32xf32>
    %cst_83 = arith.constant dense<0xFF800000> : vector<8xf32>
    %240 = vector.multi_reduction <maximumf>, %226, %cst_83 [1] : vector<8x32xf32> to vector<8xf32>
    %241 = vector.shape_cast %240 : vector<8xf32> to vector<8x1xf32>
    %242 = vector.broadcast %241 : vector<8x1xf32> to vector<8x32xf32>
    %243 = arith.subf %226, %242 : vector<8x32xf32>
    %244 = math.exp %243 : vector<8x32xf32>
    %cst_84 = arith.constant dense<0.000000e+00> : vector<8xf32>
    %245 = vector.multi_reduction <add>, %244, %cst_84 [1] : vector<8x32xf32> to vector<8xf32>
    %246 = vector.shape_cast %245 : vector<8xf32> to vector<8x1xf32>
    %247 = tpu.reciprocal %246 {approx = true} : vector<8x1xf32> -> vector<8x1xf32>
    %248 = vector.broadcast %247 : vector<8x1xf32> to vector<8x32xf32>
    %249 = arith.mulf %244, %248 : vector<8x32xf32>
    %250 = math.log %246 : vector<8x1xf32>
    %251 = vector.broadcast %250 : vector<8x1xf32> to vector<8x32xf32>
    %252 = arith.subf %243, %251 : vector<8x32xf32>
    %253 = arith.addf %236, %249 : vector<8x32xf32>
    %cst_85 = arith.constant 5.000000e-01 : f32
    %254 = vector.broadcast %cst_85 : f32 to vector<8x32xf32>
    %255 = arith.mulf %254, %253 : vector<8x32xf32>
    %256 = math.log %255 : vector<8x32xf32>
    %257 = arith.mulf %255, %256 : vector<8x32xf32>
    %cst_86 = arith.constant 5.000000e-01 : f32
    %258 = vector.broadcast %cst_86 : f32 to vector<8x32xf32>
    %259 = arith.mulf %258, %255 : vector<8x32xf32>
    %260 = arith.addf %239, %252 : vector<8x32xf32>
    %261 = arith.mulf %259, %260 : vector<8x32xf32>
    %262 = arith.subf %257, %261 : vector<8x32xf32>
    %cst_87 = arith.constant dense<0.000000e+00> : vector<8xf32>
    %263 = vector.multi_reduction <add>, %262, %cst_87 [1] : vector<8x32xf32> to vector<8xf32>
    %264 = vector.shape_cast %263 : vector<8xf32> to vector<8x1xf32>
    %cst_88 = arith.constant dense<0.000000e+00> : vector<1xf32>
    %265 = vector.multi_reduction <add>, %264, %cst_88 [0] : vector<8x1xf32> to vector<1xf32>
    %266 = vector.shape_cast %265 : vector<1xf32> to vector<1x1xf32>
    %267 = vector.shape_cast %222 : vector<8x32xf32> to vector<1x8x32xf32>
    %c0_89 = arith.constant 0 : index
    %c0_90 = arith.constant 0 : index
    %c0_91 = arith.constant 0 : index
    %268 = vector.load %arg14[%c0_89, %c0_90, %c0_91] : memref<1x8x32xf32, #tpu.memory_space<vmem>>, vector<1x8x32xf32>
    tpu.vector_store %arg14[%c0_89, %c0_90, %c0_91], %267 {strides = array<i32>} : memref<1x8x32xf32, #tpu.memory_space<vmem>>, vector<1x8x32xf32>,
    %269 = vector.shape_cast %226 : vector<8x32xf32> to vector<1x8x32xf32>
    %c0_92 = arith.constant 0 : index
    %c0_93 = arith.constant 0 : index
    %c0_94 = arith.constant 0 : index
    %270 = vector.load %arg15[%c0_92, %c0_93, %c0_94] : memref<1x8x32xf32, #tpu.memory_space<vmem>>, vector<1x8x32xf32>
    tpu.vector_store %arg15[%c0_92, %c0_93, %c0_94], %269 {strides = array<i32>} : memref<1x8x32xf32, #tpu.memory_space<vmem>>, vector<1x8x32xf32>,
    %cst_95 = arith.constant 0.000000e+00 : f32
    %271 = vector.broadcast %cst_95 : f32 to vector<8x1xf32>
    %272 = arith.subf %271, %90 : vector<8x1xf32>
    %273 = math.exp %272 : vector<8x1xf32>
    %cst_96 = arith.constant 1.000000e+00 : f32
    %274 = vector.broadcast %cst_96 : f32 to vector<8x1xf32>
    %275 = arith.addf %274, %273 : vector<8x1xf32>
    %276 = tpu.reciprocal %275 {approx = true} : vector<8x1xf32> -> vector<8x1xf32>
    %277 = vector.shape_cast %276 : vector<8x1xf32> to vector<1x8x1xf32>
    %c0_97 = arith.constant 0 : index
    %c0_98 = arith.constant 0 : index
    %c0_99 = arith.constant 0 : index
    %278 = vector.load %arg16[%c0_97, %c0_98, %c0_99] : memref<1x8x1xf32, #tpu.memory_space<vmem>>, vector<1x8x1xf32>
    tpu.vector_store %arg16[%c0_97, %c0_98, %c0_99], %277 {strides = array<i32>} : memref<1x8x1xf32, #tpu.memory_space<vmem>>, vector<1x8x1xf32>,
    %c0_100 = arith.constant 0 : index
    %c0_101 = arith.constant 0 : index
    %c0_102 = arith.constant 0 : index
    %279 = vector.load %arg17[%c0_100, %c0_101, %c0_102] : memref<1x1x1xf32, #tpu.memory_space<vmem>>, vector<1x1x1xf32>
    %280 = vector.shape_cast %279 : vector<1x1x1xf32> to vector<1x1xf32>
    %281 = vector.shape_cast %266 : vector<1x1xf32> to vector<1x1x1xf32>
    tpu.vector_store %arg17[%c0_100, %c0_101, %c0_102], %281 {strides = array<i32>} : memref<1x1x1xf32, #tpu.memory_space<vmem>>, vector<1x1x1xf32>,
    return
  }
  func.func @transform_0(%arg0: i32) -> i32 {
    %c0_i32 = arith.constant 0 : i32
    %c0_i32_0 = arith.constant 0 : i32
    return %c0_i32 : i32
  }
  func.func @transform_1(%arg0: i32) -> (i32, i32, i32) {
    %c0_i32 = arith.constant 0 : i32
    %c0_i32_0 = arith.constant 0 : i32
    %c0_i32_1 = arith.constant 0 : i32
    return %arg0, %c0_i32, %c0_i32_0 : i32, i32, i32
  }
  func.func @transform_2(%arg0: i32) -> (i32, i32, i32) {
    %c0_i32 = arith.constant 0 : i32
    %c0_i32_0 = arith.constant 0 : i32
    %c0_i32_1 = arith.constant 0 : i32
    return %arg0, %c0_i32, %c0_i32_0 : i32, i32, i32
  }
  func.func @transform_3(%arg0: i32) -> (i32, i32) {
    %c0_i32 = arith.constant 0 : i32
    %c0_i32_0 = arith.constant 0 : i32
    %c0_i32_1 = arith.constant 0 : i32
    return %c0_i32, %c0_i32_0 : i32, i32
  }
  func.func @transform_4(%arg0: i32) -> (i32, i32) {
    %c0_i32 = arith.constant 0 : i32
    %c0_i32_0 = arith.constant 0 : i32
    %c0_i32_1 = arith.constant 0 : i32
    return %c0_i32, %c0_i32_0 : i32, i32
  }
  func.func @transform_5(%arg0: i32) -> (i32, i32) {
    %c0_i32 = arith.constant 0 : i32
    %c0_i32_0 = arith.constant 0 : i32
    %c0_i32_1 = arith.constant 0 : i32
    return %c0_i32, %c0_i32_0 : i32, i32
  }
  func.func @transform_6(%arg0: i32) -> (i32, i32) {
    %c0_i32 = arith.constant 0 : i32
    %c0_i32_0 = arith.constant 0 : i32
    %c0_i32_1 = arith.constant 0 : i32
    return %c0_i32, %c0_i32_0 : i32, i32
  }
  func.func @transform_7(%arg0: i32) -> (i32, i32) {
    %c0_i32 = arith.constant 0 : i32
    %c0_i32_0 = arith.constant 0 : i32
    %c0_i32_1 = arith.constant 0 : i32
    return %c0_i32, %c0_i32_0 : i32, i32
  }
  func.func @transform_8(%arg0: i32) -> (i32, i32) {
    %c0_i32 = arith.constant 0 : i32
    %c0_i32_0 = arith.constant 0 : i32
    %c0_i32_1 = arith.constant 0 : i32
    return %c0_i32, %c0_i32_0 : i32, i32
  }
  func.func @transform_9(%arg0: i32) -> (i32, i32) {
    %c0_i32 = arith.constant 0 : i32
    %c0_i32_0 = arith.constant 0 : i32
    %c0_i32_1 = arith.constant 0 : i32
    return %c0_i32, %c0_i32_0 : i32, i32
  }
  func.func @transform_10(%arg0: i32) -> (i32, i32) {
    %c0_i32 = arith.constant 0 : i32
    %c0_i32_0 = arith.constant 0 : i32
    %c0_i32_1 = arith.constant 0 : i32
    return %c0_i32, %c0_i32_0 : i32, i32
  }
  func.func @transform_11(%arg0: i32) -> (i32, i32) {
    %c0_i32 = arith.constant 0 : i32
    %c0_i32_0 = arith.constant 0 : i32
    %c0_i32_1 = arith.constant 0 : i32
    return %c0_i32, %c0_i32_0 : i32, i32
  }
  func.func @transform_12(%arg0: i32) -> (i32, i32) {
    %c0_i32 = arith.constant 0 : i32
    %c0_i32_0 = arith.constant 0 : i32
    %c0_i32_1 = arith.constant 0 : i32
    return %c0_i32, %c0_i32_0 : i32, i32
  }
  func.func @transform_13(%arg0: i32) -> (i32, i32, i32) {
    %c0_i32 = arith.constant 0 : i32
    %c0_i32_0 = arith.constant 0 : i32
    %c0_i32_1 = arith.constant 0 : i32
    return %arg0, %c0_i32, %c0_i32_0 : i32, i32, i32
  }
  func.func @transform_14(%arg0: i32) -> (i32, i32, i32) {
    %c0_i32 = arith.constant 0 : i32
    %c0_i32_0 = arith.constant 0 : i32
    %c0_i32_1 = arith.constant 0 : i32
    return %arg0, %c0_i32, %c0_i32_0 : i32, i32, i32
  }
  func.func @transform_15(%arg0: i32) -> (i32, i32, i32) {
    %c0_i32 = arith.constant 0 : i32
    %c0_i32_0 = arith.constant 0 : i32
    %c0_i32_1 = arith.constant 0 : i32
    return %arg0, %c0_i32, %c0_i32_0 : i32, i32, i32
  }
  func.func @transform_16(%arg0: i32) -> (i32, i32, i32) {
    %c0_i32 = arith.constant 0 : i32
    %c0_i32_0 = arith.constant 0 : i32
    %c0_i32_1 = arith.constant 0 : i32
    return %arg0, %c0_i32, %c0_i32_0 : i32, i32, i32
  }
}

</mosaic_0001>

<llo_original>
// kernel: _forward_train.1
$region0: #{_forward_train.1}
  #allocation0 [shape = 'u32[]', space=smem, size = 0x4, offset = 0x4, fixed_abs, tag = 'smem constant byte address 0x4 - core index']
  #allocation1 [shape = 'u32[72,128]{1,0:T(1,128)}', space=vmem, size = 0x9000, scoped, tag = 'internal scratch']
  %s0 = inlined_call_operand.vmem [shape: f32[4], index: 0, kind: input, shape index: {}]
  %s1 = inlined_call_operand.hbm [shape: f32[2,8,32], index: 1, kind: input, shape index: {}]
  %s2 = inlined_call_operand.hbm [shape: f32[2,8,32], index: 2, kind: input, shape index: {}]
  %s3 = inlined_call_operand.hbm [shape: bf16[32,128], index: 3, kind: input, shape index: {}]
  %s4 = inlined_call_operand.vmem [shape: bf16[32,160], index: 4, kind: input, shape index: {}]
  %s5 = inlined_call_operand.hbm [shape: bf16[32,64], index: 5, kind: input, shape index: {}]
  %s6 = inlined_call_operand.vmem [shape: bf16[32,1], index: 6, kind: input, shape index: {}]
  %s7 = inlined_call_operand.hbm [shape: bf16[32,32], index: 7, kind: input, shape index: {}]
  %s8 = inlined_call_operand.vmem [shape: bf16[32,1], index: 8, kind: input, shape index: {}]
  %s9 = inlined_call_operand.hbm [shape: bf16[32,32], index: 9, kind: input, shape index: {}]
  %s10 = inlined_call_operand.hbm [shape: bf16[32,64], index: 10, kind: input, shape index: {}]
  %s11 = inlined_call_operand.hbm [shape: bf16[32,64], index: 11, kind: input, shape index: {}]
  %s12 = inlined_call_operand.hbm [shape: f32[14,32], index: 12, kind: input, shape index: {}]
  %s13 = inlined_call_operand.hbm [shape: f32[2,8,32], index: 13, kind: output, shape index: {0}]
  %s14 = inlined_call_operand.hbm [shape: f32[2,8,32], index: 14, kind: output, shape index: {1}]
  %s15 = inlined_call_operand.vmem [shape: f32[2,8,1], index: 15, kind: output, shape index: {2}]
  %s16 = inlined_call_operand.vmem [shape: f32[2,1,1], index: 16, kind: output, shape index: {3}]
  %17 = xla_tuple %s13, %s14, %s15, %s16
  %s18 = sld [smem:[#allocation0]]
  $region149: #{_forward_train.1} parent=0
    _
  %s20 = ssub.s32 1, %s18
  %s21 = scalar_select 0, %s20, %s18
  $region1: #{_forward_train.1} parent=0
    #allocation2 [shape = 'u8[512]{0}', space=smem, size = 0x200, scoped, tag = 'input window, operand 0, single buffered']
    #allocation3 [shape = 's32[2]{0}', space=sflag, size = 0x8, scoped, tag = 'scoped memory for _forward_train.1']
    #allocation4 [shape = 's32[2]{0}', space=sflag, size = 0x8, scoped, tag = 'scoped memory for _forward_train.1']
    #allocation5 [shape = 's32[2]{0}', space=sflag, size = 0x8, scoped, tag = 'scoped memory for _forward_train.1']
    #allocation6 [shape = 'u8[8192]{0}', space=vmem, size = 0x2000, scoped, tag = 'input window, operand 1']
    #allocation7 [shape = 'u8[8192]{0}', space=vmem, size = 0x2000, scoped, tag = 'input window, operand 2']
    #allocation8 [shape = 's32[2]{0}', space=sflag, size = 0x8, scoped, tag = 'scoped memory for _forward_train.1']
    #allocation9 [shape = 'u8[8192]{0}', space=vmem, size = 0x2000, scoped, tag = 'input window, operand 3, single buffered']
    #allocation10 [shape = 'u8[8192]{0}', space=vmem, size = 0x2000, scoped, tag = 'input window, operand 5, single buffered']
    #allocation11 [shape = 's32[1]{0}', space=sflag, size = 0x4, scoped, tag = 'scoped memory for _forward_train.1']
    #allocation12 [shape = 'u8[8192]{0}', space=vmem, size = 0x2000, scoped, tag = 'input window, operand 7, single buffered']
    #allocation13 [shape = 'u8[8192]{0}', space=vmem, size = 0x2000, scoped, tag = 'input window, operand 9, single buffered']
    #allocation14 [shape = 's32[1]{0}', space=sflag, size = 0x4, scoped, tag = 'scoped memory for _forward_train.1']
    #allocation15 [shape = 'u8[8192]{0}', space=vmem, size = 0x2000, scoped, tag = 'input window, operand 10, single buffered']
    #allocation16 [shape = 'u8[8192]{0}', space=vmem, size = 0x2000, scoped, tag = 'input window, operand 11, single buffered']
    #allocation17 [shape = 's32[1]{0}', space=sflag, size = 0x4, scoped, tag = 'scoped memory for _forward_train.1']
    #allocation18 [shape = 'u8[8192]{0}', space=vmem, size = 0x2000, scoped, tag = 'input window, operand 12, single buffered']
    #allocation19 [shape = 'u8[8192]{0}', space=vmem, size = 0x2000, scoped, tag = 'output window, operand 0']
    #allocation20 [shape = 'u8[8192]{0}', space=vmem, size = 0x2000, scoped, tag = 'output window, operand 1']
    #allocation21 [shape = 's32[2]{0}', space=sflag, size = 0x8, scoped, tag = 'scoped memory for _forward_train.1']
    %22 = vsyncpa [#allocation5], 0
    %23 = vsyncpa [#allocation3], 0
    %s24 = scalar_lea.sflag [#allocation3], 1
    %25 = vsyncpa %s24, 0
    %26 = vsyncpa [#allocation8], 0
    %s27 = scalar_lea.sflag [#allocation8], 1
    %28 = vsyncpa %s27, 0
    %29 = vsyncpa [#allocation11], 0
    %30 = vsyncpa [#allocation14], 0
    %31 = vsyncpa [#allocation17], 0
    %32 = vsyncpa [#allocation4], 0
    %s33 = scalar_lea.sflag [#allocation4], 1
    %34 = vsyncpa %s33, 0
    %35 = vsyncpa [#allocation21], 0
    %s36 = scalar_lea.sflag [#allocation21], 1
    %37 = vsyncpa %s36, 0
    loop: start=0, step=1, limit=4
    $region2: #{_forward_train.1} parent=1 // loop_pre_header
      _
    $region3: #{_forward_train.1} parent=1 // loop_header
      %s39 = sphi 0, %s43
      %p40 = scmp.ge.s32.totalorder %s39, 4
      %s47 = sphi 0, %s47
      %s49 = sphi 0, %s47
      %s50 = sphi 0, %s49
      %s64 = sphi 0, %s50
      %s70 = sphi 0, %s72
      %s73 = sphi 0, %s70
      %s74 = sphi 0, %s73
      %s90 = sphi 0, %s74
      %s96 = sphi 0, %s98
      %s99 = sphi 0, %s96
      %s100 = sphi 0, %s99
      %s116 = sphi 0, %s100
      %s120 = sphi 0, %s120
      %s122 = sphi 0, %s120
      %s123 = sphi 0, %s122
      %s137 = sphi 0, %s123
      %s141 = sphi 0, %s141
      %s143 = sphi 0, %s141
      %s144 = sphi 0, %s143
      %s158 = sphi 0, %s144
      %s162 = sphi 0, %s162
      %s164 = sphi 0, %s162
      %s165 = sphi 0, %s164
      %s179 = sphi 0, %s165
      %s183 = sphi 0, %s183
      %s185 = sphi 0, %s183
      %s186 = sphi 0, %s185
      %s200 = sphi 0, %s186
      %s204 = sphi 0, %s204
      %s206 = sphi 0, %s204
      %s207 = sphi 0, %s206
      %s221 = sphi 0, %s207
      %s225 = sphi 0, %s225
      %s227 = sphi 0, %s225
      %s228 = sphi 0, %s227
      %s242 = sphi 0, %s228
      %s246 = sphi 0, %s246
      %s248 = sphi 0, %s246
      %s249 = sphi 0, %s248
      %s263 = sphi 0, %s249
      %s267 = sphi 0, %s267
      %s269 = sphi 0, %s267
      %s270 = sphi 0, %s269
      %s284 = sphi 0, %s270
      %s288 = sphi 0, %s288
      %s290 = sphi 0, %s288
      %s291 = sphi 0, %s290
      %s305 = sphi 0, %s291
      %s309 = sphi 0, %s309
      %s311 = sphi 0, %s309
      %s312 = sphi 0, %s311
      %s326 = sphi 0, %s312
      %s332 = sphi 0, %s334
      %s335 = sphi 0, %s332
      %s336 = sphi 0, %s335
      %s352 = sphi 0, %s336
      %s358 = sphi 0, %s360
      %s361 = sphi 0, %s358
      %s362 = sphi 0, %s361
      %s378 = sphi 0, %s362
      %s384 = sphi 0, %s386
      %s387 = sphi 0, %s384
      %s388 = sphi 0, %s387
      %s404 = sphi 0, %s388
      %s410 = sphi 0, %s412
      %s413 = sphi 0, %s410
      %s414 = sphi 0, %s413
      %s430 = sphi 0, %s414
    $region4: #{_forward_train.1} parent=1 // loop_header_branch
      %42 = sbr.rel (%p40) target = $region8
    $region5: #{_forward_train.1} parent=1 // loop_body
      %s44 = ssub.s32 %s39, 1
      %s45 = ssub.s32 %s39, 2
      %s46 = sadd.s32 %s39, 1
      %s48 = sadd.s32 %s47, 1
      %p51 = scmp.eq.s32.totalorder %s39, 1
      %p52 = scmp.ne.s32.totalorder %s47, %s49
      %p53 = scmp.eq.s32.totalorder %s39, 0
      %p54 = por %p52, %p53
      %p55 = scmp.ne.s32.totalorder %s47, %s49
      %p56 = scmp.eq.s32.totalorder %s44, 1
      %p57 = por %p55, %p56
      %p58 = scmp.ne.s32.totalorder %s49, %s50
      %p59 = scmp.eq.s32.totalorder %s44, 0
      %p60 = por %p58, %p59
      %p61 = scmp.ne.s32.totalorder %s49, %s50
      %p62 = scmp.eq.s32.totalorder %s45, 1
      %p63 = por %p61, %p62
      %p65 = scmp.ne.s32.totalorder %s50, %s64
      %p66 = scmp.eq.s32.totalorder %s45, 0
      %p67 = por %p65, %p66
      %s68 = ssub.s32 %s39, %s46
      %p69 = scmp.eq.s32.totalorder %s68, 0
      %s71 = sadd.s32 %s70, 1
      %s72 = scalar_select %p69, %s70, %s71
      %p75 = pneg %p69
      %p76 = scmp.eq.s32.totalorder %s39, 1
      %p77 = por %p75, %p76
      %p78 = scmp.ne.s32.totalorder %s70, %s73
      %p79 = scmp.eq.s32.totalorder %s39, 0
      %p80 = por %p78, %p79
      %p81 = scmp.ne.s32.totalorder %s70, %s73
      %p82 = scmp.eq.s32.totalorder %s44, 1
      %p83 = por %p81, %p82
      %p84 = scmp.ne.s32.totalorder %s73, %s74
      %p85 = scmp.eq.s32.totalorder %s44, 0
      %p86 = por %p84, %p85
      %p87 = scmp.ne.s32.totalorder %s73, %s74
      %p88 = scmp.eq.s32.totalorder %s45, 1
      %p89 = por %p87, %p88
      %p91 = scmp.ne.s32.totalorder %s74, %s90
      %p92 = scmp.eq.s32.totalorder %s45, 0
      %p93 = por %p91, %p92
      %s94 = ssub.s32 %s39, %s46
      %p95 = scmp.eq.s32.totalorder %s94, 0
      %s97 = sadd.s32 %s96, 1
      %s98 = scalar_select %p95, %s96, %s97
      %p101 = pneg %p95
      %p102 = scmp.eq.s32.totalorder %s39, 1
      %p103 = por %p101, %p102
      %p104 = scmp.ne.s32.totalorder %s96, %s99
      %p105 = scmp.eq.s32.totalorder %s39, 0
      %p106 = por %p104, %p105
      %p107 = scmp.ne.s32.totalorder %s96, %s99
      %p108 = scmp.eq.s32.totalorder %s44, 1
      %p109 = por %p107, %p108
      %p110 = scmp.ne.s32.totalorder %s99, %s100
      %p111 = scmp.eq.s32.totalorder %s44, 0
      %p112 = por %p110, %p111
      %p113 = scmp.ne.s32.totalorder %s99, %s100
      %p114 = scmp.eq.s32.totalorder %s45, 1
      %p115 = por %p113, %p114
      %p117 = scmp.ne.s32.totalorder %s100, %s116
      %p118 = scmp.eq.s32.totalorder %s45, 0
      %p119 = por %p117, %p118
      %s121 = sadd.s32 %s120, 1
      %p124 = scmp.eq.s32.totalorder %s39, 1
      %p125 = scmp.ne.s32.totalorder %s120, %s122
      %p126 = scmp.eq.s32.totalorder %s39, 0
      %p127 = por %p125, %p126
      %p128 = scmp.ne.s32.totalorder %s120, %s122
      %p129 = scmp.eq.s32.totalorder %s44, 1
      %p130 = por %p128, %p129
      %p131 = scmp.ne.s32.totalorder %s122, %s123
      %p132 = scmp.eq.s32.totalorder %s44, 0
      %p133 = por %p131, %p132
      %p134 = scmp.ne.s32.totalorder %s122, %s123
      %p135 = scmp.eq.s32.totalorder %s45, 1
      %p136 = por %p134, %p135
      %p138 = scmp.ne.s32.totalorder %s123, %s137
      %p139 = scmp.eq.s32.totalorder %s45, 0
      %p140 = por %p138, %p139
      %s142 = sadd.s32 %s141, 1
      %p145 = scmp.eq.s32.totalorder %s39, 1
      %p146 = scmp.ne.s32.totalorder %s141, %s143
      %p147 = scmp.eq.s32.totalorder %s39, 0
      %p148 = por %p146, %p147
      %p149 = scmp.ne.s32.totalorder %s141, %s143
      %p150 = scmp.eq.s32.totalorder %s44, 1
      %p151 = por %p149, %p150
      %p152 = scmp.ne.s32.totalorder %s143, %s144
      %p153 = scmp.eq.s32.totalorder %s44, 0
      %p154 = por %p152, %p153
      %p155 = scmp.ne.s32.totalorder %s143, %s144
      %p156 = scmp.eq.s32.totalorder %s45, 1
      %p157 = por %p155, %p156
      %p159 = scmp.ne.s32.totalorder %s144, %s158
      %p160 = scmp.eq.s32.totalorder %s45, 0
      %p161 = por %p159, %p160
      %s163 = sadd.s32 %s162, 1
      %p166 = scmp.eq.s32.totalorder %s39, 1
      %p167 = scmp.ne.s32.totalorder %s162, %s164
      %p168 = scmp.eq.s32.totalorder %s39, 0
      %p169 = por %p167, %p168
      %p170 = scmp.ne.s32.totalorder %s162, %s164
      %p171 = scmp.eq.s32.totalorder %s44, 1
      %p172 = por %p170, %p171
      %p173 = scmp.ne.s32.totalorder %s164, %s165
      %p174 = scmp.eq.s32.totalorder %s44, 0
      %p175 = por %p173, %p174
      %p176 = scmp.ne.s32.totalorder %s164, %s165
      %p177 = scmp.eq.s32.totalorder %s45, 1
      %p178 = por %p176, %p177
      %p180 = scmp.ne.s32.totalorder %s165, %s179
      %p181 = scmp.eq.s32.totalorder %s45, 0
      %p182 = por %p180, %p181
      %s184 = sadd.s32 %s183, 1
      %p187 = scmp.eq.s32.totalorder %s39, 1
      %p188 = scmp.ne.s32.totalorder %s183, %s185
      %p189 = scmp.eq.s32.totalorder %s39, 0
      %p190 = por %p188, %p189
      %p191 = scmp.ne.s32.totalorder %s183, %s185
      %p192 = scmp.eq.s32.totalorder %s44, 1
      %p193 = por %p191, %p192
      %p194 = scmp.ne.s32.totalorder %s185, %s186
      %p195 = scmp.eq.s32.totalorder %s44, 0
      %p196 = por %p194, %p195
      %p197 = scmp.ne.s32.totalorder %s185, %s186
      %p198 = scmp.eq.s32.totalorder %s45, 1
      %p199 = por %p197, %p198
      %p201 = scmp.ne.s32.totalorder %s186, %s200
      %p202 = scmp.eq.s32.totalorder %s45, 0
      %p203 = por %p201, %p202
      %s205 = sadd.s32 %s204, 1
      %p208 = scmp.eq.s32.totalorder %s39, 1
      %p209 = scmp.ne.s32.totalorder %s204, %s206
      %p210 = scmp.eq.s32.totalorder %s39, 0
      %p211 = por %p209, %p210
      %p212 = scmp.ne.s32.totalorder %s204, %s206
      %p213 = scmp.eq.s32.totalorder %s44, 1
      %p214 = por %p212, %p213
      %p215 = scmp.ne.s32.totalorder %s206, %s207
      %p216 = scmp.eq.s32.totalorder %s44, 0
      %p217 = por %p215, %p216
      %p218 = scmp.ne.s32.totalorder %s206, %s207
      %p219 = scmp.eq.s32.totalorder %s45, 1
      %p220 = por %p218, %p219
      %p222 = scmp.ne.s32.totalorder %s207, %s221
      %p223 = scmp.eq.s32.totalorder %s45, 0
      %p224 = por %p222, %p223
      %s226 = sadd.s32 %s225, 1
      %p229 = scmp.eq.s32.totalorder %s39, 1
      %p230 = scmp.ne.s32.totalorder %s225, %s227
      %p231 = scmp.eq.s32.totalorder %s39, 0
      %p232 = por %p230, %p231
      %p233 = scmp.ne.s32.totalorder %s225, %s227
      %p234 = scmp.eq.s32.totalorder %s44, 1
      %p235 = por %p233, %p234
      %p236 = scmp.ne.s32.totalorder %s227, %s228
      %p237 = scmp.eq.s32.totalorder %s44, 0
      %p238 = por %p236, %p237
      %p239 = scmp.ne.s32.totalorder %s227, %s228
      %p240 = scmp.eq.s32.totalorder %s45, 1
      %p241 = por %p239, %p240
      %p243 = scmp.ne.s32.totalorder %s228, %s242
      %p244 = scmp.eq.s32.totalorder %s45, 0
      %p245 = por %p243, %p244
      %s247 = sadd.s32 %s246, 1
      %p250 = scmp.eq.s32.totalorder %s39, 1
      %p251 = scmp.ne.s32.totalorder %s246, %s248
      %p252 = scmp.eq.s32.totalorder %s39, 0
      %p253 = por %p251, %p252
      %p254 = scmp.ne.s32.totalorder %s246, %s248
      %p255 = scmp.eq.s32.totalorder %s44, 1
      %p256 = por %p254, %p255
      %p257 = scmp.ne.s32.totalorder %s248, %s249
      %p258 = scmp.eq.s32.totalorder %s44, 0
      %p259 = por %p257, %p258
      %p260 = scmp.ne.s32.totalorder %s248, %s249
      %p261 = scmp.eq.s32.totalorder %s45, 1
      %p262 = por %p260, %p261
      %p264 = scmp.ne.s32.totalorder %s249, %s263
      %p265 = scmp.eq.s32.totalorder %s45, 0
      %p266 = por %p264, %p265
      %s268 = sadd.s32 %s267, 1
      %p271 = scmp.eq.s32.totalorder %s39, 1
      %p272 = scmp.ne.s32.totalorder %s267, %s269
      %p273 = scmp.eq.s32.totalorder %s39, 0
      %p274 = por %p272, %p273
      %p275 = scmp.ne.s32.totalorder %s267, %s269
      %p276 = scmp.eq.s32.totalorder %s44, 1
      %p277 = por %p275, %p276
      %p278 = scmp.ne.s32.totalorder %s269, %s270
      %p279 = scmp.eq.s32.totalorder %s44, 0
      %p280 = por %p278, %p279
      %p281 = scmp.ne.s32.totalorder %s269, %s270
      %p282 = scmp.eq.s32.totalorder %s45, 1
      %p283 = por %p281, %p282
      %p285 = scmp.ne.s32.totalorder %s270, %s284
      %p286 = scmp.eq.s32.totalorder %s45, 0
      %p287 = por %p285, %p286
      %s289 = sadd.s32 %s288, 1
      %p292 = scmp.eq.s32.totalorder %s39, 1
      %p293 = scmp.ne.s32.totalorder %s288, %s290
      %p294 = scmp.eq.s32.totalorder %s39, 0
      %p295 = por %p293, %p294
      %p296 = scmp.ne.s32.totalorder %s288, %s290
      %p297 = scmp.eq.s32.totalorder %s44, 1
      %p298 = por %p296, %p297
      %p299 = scmp.ne.s32.totalorder %s290, %s291
      %p300 = scmp.eq.s32.totalorder %s44, 0
      %p301 = por %p299, %p300
      %p302 = scmp.ne.s32.totalorder %s290, %s291
      %p303 = scmp.eq.s32.totalorder %s45, 1
      %p304 = por %p302, %p303
      %p306 = scmp.ne.s32.totalorder %s291, %s305
      %p307 = scmp.eq.s32.totalorder %s45, 0
      %p308 = por %p306, %p307
      %s310 = sadd.s32 %s309, 1
      %p313 = scmp.eq.s32.totalorder %s39, 1
      %p314 = scmp.ne.s32.totalorder %s309, %s311
      %p315 = scmp.eq.s32.totalorder %s39, 0
      %p316 = por %p314, %p315
      %p317 = scmp.ne.s32.totalorder %s309, %s311
      %p318 = scmp.eq.s32.totalorder %s44, 1
      %p319 = por %p317, %p318
      %p320 = scmp.ne.s32.totalorder %s311, %s312
      %p321 = scmp.eq.s32.totalorder %s44, 0
      %p322 = por %p320, %p321
      %p323 = scmp.ne.s32.totalorder %s311, %s312
      %p324 = scmp.eq.s32.totalorder %s45, 1
      %p325 = por %p323, %p324
      %p327 = scmp.ne.s32.totalorder %s312, %s326
      %p328 = scmp.eq.s32.totalorder %s45, 0
      %p329 = por %p327, %p328
      %s330 = ssub.s32 %s39, %s46
      %p331 = scmp.eq.s32.totalorder %s330, 0
      %s333 = sadd.s32 %s332, 1
      %s334 = scalar_select %p331, %s332, %s333
      %p337 = pneg %p331
      %p338 = scmp.eq.s32.totalorder %s39, 1
      %p339 = por %p337, %p338
      %p340 = scmp.ne.s32.totalorder %s332, %s335
      %p341 = scmp.eq.s32.totalorder %s39, 0
      %p342 = por %p340, %p341
      %p343 = scmp.ne.s32.totalorder %s332, %s335
      %p344 = scmp.eq.s32.totalorder %s44, 1
      %p345 = por %p343, %p344
      %p346 = scmp.ne.s32.totalorder %s335, %s336
      %p347 = scmp.eq.s32.totalorder %s44, 0
      %p348 = por %p346, %p347
      %p349 = scmp.ne.s32.totalorder %s335, %s336
      %p350 = scmp.eq.s32.totalorder %s45, 1
      %p351 = por %p349, %p350
      %p353 = scmp.ne.s32.totalorder %s336, %s352
      %p354 = scmp.eq.s32.totalorder %s45, 0
      %p355 = por %p353, %p354
      %s356 = ssub.s32 %s39, %s46
      %p357 = scmp.eq.s32.totalorder %s356, 0
      %s359 = sadd.s32 %s358, 1
      %s360 = scalar_select %p357, %s358, %s359
      %p363 = pneg %p357
      %p364 = scmp.eq.s32.totalorder %s39, 1
      %p365 = por %p363, %p364
      %p366 = scmp.ne.s32.totalorder %s358, %s361
      %p367 = scmp.eq.s32.totalorder %s39, 0
      %p368 = por %p366, %p367
      %p369 = scmp.ne.s32.totalorder %s358, %s361
      %p370 = scmp.eq.s32.totalorder %s44, 1
      %p371 = por %p369, %p370
      %p372 = scmp.ne.s32.totalorder %s361, %s362
      %p373 = scmp.eq.s32.totalorder %s44, 0
      %p374 = por %p372, %p373
      %p375 = scmp.ne.s32.totalorder %s361, %s362
      %p376 = scmp.eq.s32.totalorder %s45, 1
      %p377 = por %p375, %p376
      %p379 = scmp.ne.s32.totalorder %s362, %s378
      %p380 = scmp.eq.s32.totalorder %s45, 0
      %p381 = por %p379, %p380
      %s382 = ssub.s32 %s39, %s46
      %p383 = scmp.eq.s32.totalorder %s382, 0
      %s385 = sadd.s32 %s384, 1
      %s386 = scalar_select %p383, %s384, %s385
      %p389 = pneg %p383
      %p390 = scmp.eq.s32.totalorder %s39, 1
      %p391 = por %p389, %p390
      %p392 = scmp.ne.s32.totalorder %s384, %s387
      %p393 = scmp.eq.s32.totalorder %s39, 0
      %p394 = por %p392, %p393
      %p395 = scmp.ne.s32.totalorder %s384, %s387
      %p396 = scmp.eq.s32.totalorder %s44, 1
      %p397 = por %p395, %p396
      %p398 = scmp.ne.s32.totalorder %s387, %s388
      %p399 = scmp.eq.s32.totalorder %s44, 0
      %p400 = por %p398, %p399
      %p401 = scmp.ne.s32.totalorder %s387, %s388
      %p402 = scmp.eq.s32.totalorder %s45, 1
      %p403 = por %p401, %p402
      %p405 = scmp.ne.s32.totalorder %s388, %s404
      %p406 = scmp.eq.s32.totalorder %s45, 0
      %p407 = por %p405, %p406
      %s408 = ssub.s32 %s39, %s46
      %p409 = scmp.eq.s32.totalorder %s408, 0
      %s411 = sadd.s32 %s410, 1
      %s412 = scalar_select %p409, %s410, %s411
      %p415 = pneg %p409
      %p416 = scmp.eq.s32.totalorder %s39, 1
      %p417 = por %p415, %p416
      %p418 = scmp.ne.s32.totalorder %s410, %s413
      %p419 = scmp.eq.s32.totalorder %s39, 0
      %p420 = por %p418, %p419
      %p421 = scmp.ne.s32.totalorder %s410, %s413
      %p422 = scmp.eq.s32.totalorder %s44, 1
      %p423 = por %p421, %p422
      %p424 = scmp.ne.s32.totalorder %s413, %s414
      %p425 = scmp.eq.s32.totalorder %s44, 0
      %p426 = por %p424, %p425
      %p427 = scmp.ne.s32.totalorder %s413, %s414
      %p428 = scmp.eq.s32.totalorder %s45, 1
      %p429 = por %p427, %p428
      %p431 = scmp.ne.s32.totalorder %s414, %s430
      %p432 = scmp.eq.s32.totalorder %s45, 0
      %p433 = por %p431, %p432
      %p434 = scmp.le.s32.totalorder 1, %s39
      %p435 = scmp.lt.s32.totalorder %s39, 3
      %p436 = pnand %p434, %p435
      %p437 = pneg %p436
      // Predicated region
      $region9: #{_forward_train.1} parent=5 // pred_check
        _
      $region10: #{_forward_train.1} parent=5 // pred_check_branch
        %439 = sbr.rel (%p436) target = $region12
      $region11: #{_forward_train.1} parent=5 // pred_region
        %s440 = ssub.s32 %s39, 1
        // Predicated region
        $region13: #{_forward_train.1} parent=11 // pred_check
          %p441 = pneg %p60
        $region14: #{_forward_train.1} parent=11 // pred_check_branch
          %443 = sbr.rel (%p441) target = $region16
        $region15: #{_forward_train.1} parent=11 // pred_region
          %445 = vsyncadd [#allocation5], 0
          %s447 = sshll.u32 %s0, 4
          %s448 = int_to_ptr.vmem [resolvable:$true] %s447
          %450 = dma.vmem_to_smem %s448, 16, [#allocation2], [#allocation5]
        $region16: #{_forward_train.1} parent=11 // pred_fallthru
          _
        // Predicated region
        $region17: #{_forward_train.1} parent=11 // pred_check
          %p451 = pneg %p133
        $region18: #{_forward_train.1} parent=11 // pred_check_branch
          %453 = sbr.rel (%p451) target = $region20
        $region19: #{_forward_train.1} parent=11 // pred_region
          %455 = vsyncadd [#allocation8], 0
          %s456 = sshll.u32 %s3, 4
          %s457 = int_to_ptr.hbm [resolvable:$true] %s456
          %s458 = sshll.u32 [#allocation9], 4
          %s459 = int_to_ptr.vmem [resolvable:$true] %s458
          %464 = dma.hbm_to_vmem [thread:$0]  %s457, 256, %s459, [#allocation8], 64, 64, 4
        $region20: #{_forward_train.1} parent=11 // pred_fallthru
          _
        // Predicated region
        $region21: #{_forward_train.1} parent=11 // pred_check
          %p465 = pneg %p154
        $region22: #{_forward_train.1} parent=11 // pred_check_branch
          %467 = sbr.rel (%p465) target = $region24
        $region23: #{_forward_train.1} parent=11 // pred_region
          _
        $region24: #{_forward_train.1} parent=11 // pred_fallthru
          _
        // Predicated region
        $region25: #{_forward_train.1} parent=11 // pred_check
          %p468 = pneg %p175
        $region26: #{_forward_train.1} parent=11 // pred_check_branch
          %470 = sbr.rel (%p468) target = $region28
        $region27: #{_forward_train.1} parent=11 // pred_region
          %472 = vsyncadd [#allocation11], 0
          %s473 = sshll.u32 %s5, 4
          %s474 = int_to_ptr.hbm [resolvable:$true] %s473
          %s475 = sshll.u32 [#allocation10], 4
          %s476 = int_to_ptr.vmem [resolvable:$true] %s475
          %481 = dma.hbm_to_vmem [thread:$0]  %s474, 256, %s476, [#allocation11], 64, 64, 4
        $region28: #{_forward_train.1} parent=11 // pred_fallthru
          _
        // Predicated region
        $region29: #{_forward_train.1} parent=11 // pred_check
          %p482 = pneg %p196
        $region30: #{_forward_train.1} parent=11 // pred_check_branch
          %484 = sbr.rel (%p482) target = $region32
        $region31: #{_forward_train.1} parent=11 // pred_region
          _
        $region32: #{_forward_train.1} parent=11 // pred_fallthru
          _
        // Predicated region
        $region33: #{_forward_train.1} parent=11 // pred_check
          %p485 = pneg %p217
        $region34: #{_forward_train.1} parent=11 // pred_check_branch
          %487 = sbr.rel (%p485) target = $region36
        $region35: #{_forward_train.1} parent=11 // pred_region
          %489 = vsyncadd [#allocation11], 0
          %s490 = sshll.u32 %s7, 4
          %s491 = int_to_ptr.hbm [resolvable:$true] %s490
          %s492 = sshll.u32 [#allocation12], 4
          %s493 = int_to_ptr.vmem [resolvable:$true] %s492
          %498 = dma.hbm_to_vmem [thread:$0]  %s491, 256, %s493, [#allocation11], 64, 64, 4
        $region36: #{_forward_train.1} parent=11 // pred_fallthru
          _
        // Predicated region
        $region37: #{_forward_train.1} parent=11 // pred_check
          %p499 = pneg %p238
        $region38: #{_forward_train.1} parent=11 // pred_check_branch
          %501 = sbr.rel (%p499) target = $region40
        $region39: #{_forward_train.1} parent=11 // pred_region
          _
        $region40: #{_forward_train.1} parent=11 // pred_fallthru
          _
        // Predicated region
        $region41: #{_forward_train.1} parent=11 // pred_check
          %p502 = pneg %p259
        $region42: #{_forward_train.1} parent=11 // pred_check_branch
          %504 = sbr.rel (%p502) target = $region44
        $region43: #{_forward_train.1} parent=11 // pred_region
          %506 = vsyncadd [#allocation14], 0
          %s507 = sshll.u32 %s9, 4
          %s508 = int_to_ptr.hbm [resolvable:$true] %s507
          %s509 = sshll.u32 [#allocation13], 4
          %s510 = int_to_ptr.vmem [resolvable:$true] %s509
          %515 = dma.hbm_to_vmem [thread:$0]  %s508, 256, %s510, [#allocation14], 64, 64, 4
        $region44: #{_forward_train.1} parent=11 // pred_fallthru
          _
        // Predicated region
        $region45: #{_forward_train.1} parent=11 // pred_check
          %p516 = pneg %p280
        $region46: #{_forward_train.1} parent=11 // pred_check_branch
          %518 = sbr.rel (%p516) target = $region48
        $region47: #{_forward_train.1} parent=11 // pred_region
          %520 = vsyncadd [#allocation14], 0
          %s521 = sshll.u32 %s10, 4
          %s522 = int_to_ptr.hbm [resolvable:$true] %s521
          %s523 = sshll.u32 [#allocation15], 4
          %s524 = int_to_ptr.vmem [resolvable:$true] %s523
          %529 = dma.hbm_to_vmem [thread:$0]  %s522, 256, %s524, [#allocation14], 64, 64, 4
        $region48: #{_forward_train.1} parent=11 // pred_fallthru
          _
        // Predicated region
        $region49: #{_forward_train.1} parent=11 // pred_check
          %p530 = pneg %p301
        $region50: #{_forward_train.1} parent=11 // pred_check_branch
          %532 = sbr.rel (%p530) target = $region52
        $region51: #{_forward_train.1} parent=11 // pred_region
          %534 = vsyncadd [#allocation17], 0
          %s535 = sshll.u32 %s11, 4
          %s536 = int_to_ptr.hbm [resolvable:$true] %s535
          %s537 = sshll.u32 [#allocation16], 4
          %s538 = int_to_ptr.vmem [resolvable:$true] %s537
          %543 = dma.hbm_to_vmem [thread:$0]  %s536, 256, %s538, [#allocation17], 64, 64, 4
        $region52: #{_forward_train.1} parent=11 // pred_fallthru
          _
        // Predicated region
        $region53: #{_forward_train.1} parent=11 // pred_check
          %p544 = pneg %p322
        $region54: #{_forward_train.1} parent=11 // pred_check_branch
          %546 = sbr.rel (%p544) target = $region56
        $region55: #{_forward_train.1} parent=11 // pred_region
          %548 = vsyncadd [#allocation17], 0
          %s549 = sshll.u32 %s12, 4
          %s550 = int_to_ptr.hbm [resolvable:$true] %s549
          %s551 = sshll.u32 [#allocation18], 4
          %s552 = int_to_ptr.vmem [resolvable:$true] %s551
          %557 = dma.hbm_to_vmem [thread:$0]  %s550, 256, %s552, [#allocation17], 128, 128, 8
        $region56: #{_forward_train.1} parent=11 // pred_fallthru
          _
      $region12: #{_forward_train.1} parent=5 // pred_fallthru
        _
      %p558 = scmp.lt.s32.totalorder %s39, 2
      // Predicated region
      $region57: #{_forward_train.1} parent=5 // pred_check
        %p559 = pneg %p558
      $region58: #{_forward_train.1} parent=5 // pred_check_branch
        %561 = sbr.rel (%p559) target = $region60
      $region59: #{_forward_train.1} parent=5 // pred_region
        // Predicated region
        $region61: #{_forward_train.1} parent=59 // pred_check
          %p562 = pneg %p80
        $region62: #{_forward_train.1} parent=59 // pred_check_branch
          %564 = sbr.rel (%p562) target = $region64
        $region63: #{_forward_train.1} parent=59 // pred_region
          %s565 = sand.u32 %s70, 1
          %s566 = scalar_lea.sflag [#allocation3], %s565
          %s567 = sand.u32 %s70, 1
          %s568 = smul.addr %s567, 8
          %s569 = scalar_lea.vmem [#allocation6], %s568
          %571 = vsyncadd %s566, 0
          %s572 = smul.addr %s39, 8
          %s573 = scalar_lea.hbm %s1, %s572
          %s575 = sshll.u32 %s573, 4
          %s576 = int_to_ptr.hbm [resolvable:$true] %s575
          %s577 = sshll.u32 %s569, 4
          %s578 = int_to_ptr.vmem [resolvable:$true] %s577
          %580 = dma.hbm_to_vmem [thread:$0]  %s576, 128, %s578, %s566
        $region64: #{_forward_train.1} parent=59 // pred_fallthru
          _
        // Predicated region
        $region65: #{_forward_train.1} parent=59 // pred_check
          %p581 = pneg %p106
        $region66: #{_forward_train.1} parent=59 // pred_check_branch
          %583 = sbr.rel (%p581) target = $region68
        $region67: #{_forward_train.1} parent=59 // pred_region
          %s584 = sand.u32 %s39, 1
          %s585 = scalar_lea.sflag [#allocation8], %s584
          %s586 = sand.u32 %s96, 1
          %s587 = smul.addr %s586, 8
          %s588 = scalar_lea.vmem [#allocation7], %s587
          %590 = vsyncadd %s585, 0
          %s591 = smul.addr %s39, 8
          %s592 = scalar_lea.hbm %s2, %s591
          %s594 = sshll.u32 %s592, 4
          %s595 = int_to_ptr.hbm [resolvable:$true] %s594
          %s596 = sshll.u32 %s588, 4
          %s597 = int_to_ptr.vmem [resolvable:$true] %s596
          %599 = dma.hbm_to_vmem [thread:$0]  %s595, 128, %s597, %s585
        $region68: #{_forward_train.1} parent=59 // pred_fallthru
          _
      $region60: #{_forward_train.1} parent=5 // pred_fallthru
        _
      %p600 = scmp.le.s32.totalorder 1, %s39
      %p601 = scmp.lt.s32.totalorder %s39, 3
      %p602 = pnand %p600, %p601
      %p603 = pneg %p602
      // Predicated region
      $region69: #{_forward_train.1} parent=5 // pred_check
        _
      $region70: #{_forward_train.1} parent=5 // pred_check_branch
        %605 = sbr.rel (%p602) target = $region72
      $region71: #{_forward_train.1} parent=5 // pred_region
        %s606 = ssub.s32 %s39, 1
        // Predicated region
        $region73: #{_forward_train.1} parent=71 // pred_check
          %p607 = pneg %p60
        $region74: #{_forward_train.1} parent=71 // pred_check_branch
          %609 = sbr.rel (%p607) target = $region76
        $region75: #{_forward_train.1} parent=71 // pred_region
          %611 = dma.done [#allocation5], 16
        $region76: #{_forward_train.1} parent=71 // pred_fallthru
          _
        %s612 = sand.u32 %s73, 1
        %s613 = scalar_lea.sflag [#allocation3], %s612
        %s614 = sand.u32 %s73, 1
        %s615 = smul.addr %s614, 8
        %s616 = scalar_lea.vmem [#allocation6], %s615
        // Predicated region
        $region77: #{_forward_train.1} parent=71 // pred_check
          %p617 = pneg %p86
        $region78: #{_forward_train.1} parent=71 // pred_check_branch
          %619 = sbr.rel (%p617) target = $region80
        $region79: #{_forward_train.1} parent=71 // pred_region
          %621 = dma.done %s613, 128
        $region80: #{_forward_train.1} parent=71 // pred_fallthru
          _
        %s622 = sand.u32 %s44, 1
        %s623 = scalar_lea.sflag [#allocation8], %s622
        %s624 = sand.u32 %s99, 1
        %s625 = smul.addr %s624, 8
        %s626 = scalar_lea.vmem [#allocation7], %s625
        // Predicated region
        $region81: #{_forward_train.1} parent=71 // pred_check
          %p627 = pneg %p112
        $region82: #{_forward_train.1} parent=71 // pred_check_branch
          %629 = sbr.rel (%p627) target = $region84
        $region83: #{_forward_train.1} parent=71 // pred_region
          %631 = dma.done %s623, 128
        $region84: #{_forward_train.1} parent=71 // pred_fallthru
          _
        // Predicated region
        $region85: #{_forward_train.1} parent=71 // pred_check
          %p632 = pneg %p133
        $region86: #{_forward_train.1} parent=71 // pred_check_branch
          %634 = sbr.rel (%p632) target = $region88
        $region87: #{_forward_train.1} parent=71 // pred_region
          %636 = dma.done [#allocation8], 256
        $region88: #{_forward_train.1} parent=71 // pred_fallthru
          _
        // Predicated region
        $region89: #{_forward_train.1} parent=71 // pred_check
          %p637 = pneg %p175
        $region90: #{_forward_train.1} parent=71 // pred_check_branch
          %639 = sbr.rel (%p637) target = $region92
        $region91: #{_forward_train.1} parent=71 // pred_region
          %641 = dma.done [#allocation11], 256
        $region92: #{_forward_train.1} parent=71 // pred_fallthru
          _
        // Predicated region
        $region93: #{_forward_train.1} parent=71 // pred_check
          %p642 = pneg %p217
        $region94: #{_forward_train.1} parent=71 // pred_check_branch
          %644 = sbr.rel (%p642) target = $region96
        $region95: #{_forward_train.1} parent=71 // pred_region
          %646 = dma.done [#allocation11], 256
        $region96: #{_forward_train.1} parent=71 // pred_fallthru
          _
        // Predicated region
        $region97: #{_forward_train.1} parent=71 // pred_check
          %p647 = pneg %p259
        $region98: #{_forward_train.1} parent=71 // pred_check_branch
          %649 = sbr.rel (%p647) target = $region100
        $region99: #{_forward_train.1} parent=71 // pred_region
          %651 = dma.done [#allocation14], 256
        $region100: #{_forward_train.1} parent=71 // pred_fallthru
          _
        // Predicated region
        $region101: #{_forward_train.1} parent=71 // pred_check
          %p652 = pneg %p280
        $region102: #{_forward_train.1} parent=71 // pred_check_branch
          %654 = sbr.rel (%p652) target = $region104
        $region103: #{_forward_train.1} parent=71 // pred_region
          %656 = dma.done [#allocation14], 256
        $region104: #{_forward_train.1} parent=71 // pred_fallthru
          _
        // Predicated region
        $region105: #{_forward_train.1} parent=71 // pred_check
          %p657 = pneg %p301
        $region106: #{_forward_train.1} parent=71 // pred_check_branch
          %659 = sbr.rel (%p657) target = $region108
        $region107: #{_forward_train.1} parent=71 // pred_region
          %661 = dma.done [#allocation17], 256
        $region108: #{_forward_train.1} parent=71 // pred_fallthru
          _
        // Predicated region
        $region109: #{_forward_train.1} parent=71 // pred_check
          %p662 = pneg %p322
        $region110: #{_forward_train.1} parent=71 // pred_check_branch
          %664 = sbr.rel (%p662) target = $region112
        $region111: #{_forward_train.1} parent=71 // pred_region
          %666 = dma.done [#allocation17], 256
        $region112: #{_forward_train.1} parent=71 // pred_fallthru
          _
        %667 = sfence
        %p668 = pneg %p60
        %p669 = pneg %p57
        %s670 = sand.u32 %s73, 1
        %s671 = scalar_lea.sflag [#allocation3], %s670
        %s672 = sand.u32 %s73, 1
        %s673 = smul.addr %s672, 8
        %s674 = scalar_lea.vmem [#allocation6], %s673
        %p675 = pneg %p86
        %p676 = pneg %p83
        %s677 = sand.u32 %s44, 1
        %s678 = scalar_lea.sflag [#allocation8], %s677
        %s679 = sand.u32 %s99, 1
        %s680 = smul.addr %s679, 8
        %s681 = scalar_lea.vmem [#allocation7], %s680
        %p682 = pneg %p112
        %p683 = pneg %p109
        %p684 = pneg %p133
        %p685 = pneg %p130
        %p686 = pneg %p154
        %p687 = pneg %p151
        %p688 = pneg %p175
        %p689 = pneg %p172
        %p690 = pneg %p196
        %p691 = pneg %p193
        %p692 = pneg %p217
        %p693 = pneg %p214
        %p694 = pneg %p238
        %p695 = pneg %p235
        %p696 = pneg %p259
        %p697 = pneg %p256
        %p698 = pneg %p280
        %p699 = pneg %p277
        %p700 = pneg %p301
        %p701 = pneg %p298
        %p702 = pneg %p322
        %p703 = pneg %p319
        %p704 = pneg %p348
        %p705 = pneg %p345
        %s706 = sand.u32 %s335, 1
        %s707 = scalar_lea.sflag [#allocation4], %s706
        %s708 = sand.u32 %s335, 1
        %s709 = smul.addr %s708, 8
        %s710 = scalar_lea.vmem [#allocation19], %s709
        %p711 = pneg %p374
        %p712 = pneg %p371
        %s713 = sand.u32 %s361, 1
        %s714 = scalar_lea.sflag [#allocation21], %s713
        %s715 = sand.u32 %s361, 1
        %s716 = smul.addr %s715, 8
        %s717 = scalar_lea.vmem [#allocation20], %s716
        %p718 = pneg %p400
        %p719 = pneg %p397
        %p720 = scmp.lt.s32.totalorder %s44, 1
        %s721 = scalar_select %p720, %s44, 1
        %s722 = smul.addr %s721, 8
        %s723 = scalar_lea.vmem %s15, %s722
        %p724 = pneg %p426
        %p725 = pneg %p423
        %p726 = scmp.lt.s32.totalorder %s44, 1
        %s727 = scalar_select %p726, %s44, 1
        %s728 = scalar_lea.vmem %s16, %s727
        %p729 = scmp.lt.s32.totalorder %s44, 1
        %s730 = scalar_select %p729, %s44, 1
        %s731 = smul.addr %s730, 8
        %s732 = scalar_lea.vmem %s15, %s731
        %p733 = scmp.lt.s32.totalorder %s44, 1
        %s734 = scalar_select %p733, %s44, 1
        %s735 = scalar_lea.vmem %s16, %s734
        %v737 = vld [vmem:[%s616] sm:$0xff]
        %v738 = vld [vmem:[%s626] sm:$0xff]
        %v739 = vld [vmem:[#allocation18] sm:$0x1]
        %v740 = vld [vmem:[#allocation18 + $0x1] sm:$0x1]
        %v741 = vld [vmem:[#allocation18 + $0x2] sm:$0x1]
        %v742 = vld [vmem:[#allocation18 + $0x3] sm:$0x1]
        %v743 = vld [vmem:[#allocation18 + $0x4] sm:$0x1]
        %v744 = vld [vmem:[#allocation18 + $0x5] sm:$0x1]
        %v745 = vld [vmem:[#allocation18 + $0x6] sm:$0x1]
        %v746 = vld [vmem:[#allocation18 + $0x7] sm:$0x1]
        %v747 = vld [vmem:[#allocation18 + $0x8] sm:$0x1]
        %v748 = vld [vmem:[#allocation18 + $0x9] sm:$0x1]
        %v749 = vld [vmem:[#allocation18 + $0xa] sm:$0x1]
        %v750 = vld [vmem:[#allocation18 + $0xb] sm:$0x1]
        %v751 = vld [vmem:[#allocation18 + $0xc] sm:$0x1]
        %v752 = vld [vmem:[#allocation18 + $0xd] sm:$0x1]
        %s753 = sld [smem:[#allocation2]]
        %s754 = sld [smem:[#allocation2 + $0x1]]
        %s755 = sld [smem:[#allocation2 + $0x2]]
        %v756 = vpack.c.bf16 %v737, %v737
        %v757 = vld [vmem:[#allocation9] sm:$0xf]
        %v758 = vld [vmem:[#allocation9 + $0x4] sm:$0xf]
        %v759 = vld [vmem:[#allocation9 + $0x8] sm:$0xf]
        %v760 = vld [vmem:[#allocation9 + $0xc] sm:$0xf]
        %v765 = vunpack.c.l.b16 %v757
        %v766 = vunpack.c.l.b16 %v758
        %v767 = vunpack.c.l.b16 %v759
        %v768 = vunpack.c.l.b16 %v760
        %v769 = vpack.c.b16 %v766, %v765
        %v770 = vpack.c.b16 %v768, %v767
        %vm773 = vcmask 261120
        %v775 = vsel %vm773, %v756, 0
        %777 = vmatpush.bf16.msra.mxu0 0
        %778 = vmatpush.bf16.msra.mxu0 0
        %779 = vmatpush.bf16.msra.mxu0 0
        %780 = vmatpush.bf16.msra.mxu0 0
        %781 = vmatpush.bf16.msra.mxu0 0
        %782 = vmatpush.bf16.msra.mxu0 0
        %783 = vmatpush.bf16.msra.mxu0 %v770
        %784 = vmatpush.bf16.msra.mxu0 %v769
        %785 = vmatmul.bf16.gmra.mxu0 %v775
        %v786 = vpop.f32.mrf.mxu0
        %v787 = vadd.f32 0.0, %v786
        %v788 = vpop.f32.mrf.mxu0
        %789 = vdwg.mxu0
        %v790 = vpack.c.bf16 %v738, %v738
        %v791 = vld [vmem:[%s4] sm:$0xff]
        %v792 = vld [vmem:[%s4 + $0x8] sm:$0xff]
        %v793 = vld [vmem:[%s4 + $0x10] sm:$0xff]
        %v794 = vld [vmem:[%s4 + $0x18] sm:$0xff]
        %v799 = vunpack.c.l.b16 %v791
        %v800 = vunpack.c.h.b16 %v791
        %v801 = vunpack.c.l.b16 %v792
        %v802 = vunpack.c.h.b16 %v792
        %v803 = vunpack.c.l.b16 %v793
        %v804 = vunpack.c.h.b16 %v793
        %v805 = vunpack.c.l.b16 %v794
        %v806 = vunpack.c.h.b16 %v794
        %v807 = vpack.c.b16 %v801, %v799
        %v808 = vpack.c.b16 %v802, %v800
        %v809 = vpack.c.b16 %v805, %v803
        %v810 = vpack.c.b16 %v806, %v804
        %v816 = vsel %vm773, %v790, 0
        %818 = vmatpush.bf16.msra.mxu0 0
        %819 = vmatpush.bf16.msra.mxu0 0
        %820 = vmatpush.bf16.msra.mxu0 0
        %821 = vmatpush.bf16.msra.mxu0 0
        %822 = vmatpush.bf16.msra.mxu0 0
        %823 = vmatpush.bf16.msra.mxu0 0
        %824 = vmatpush.bf16.msra.mxu0 %v809
        %825 = vmatpush.bf16.msra.mxu0 %v807
        %826 = vmatmul.bf16.gmra.mxu0 %v816
        %v827 = vpop.f32.mrf.mxu0
        %v828 = vadd.f32 0.0, %v827
        %v829 = vpop.f32.mrf.mxu0
        %830 = vdwg.mxu0
        %831 = vmatpush.bf16.msra.mxu0 0
        %832 = vmatpush.bf16.msra.mxu0 0
        %833 = vmatpush.bf16.msra.mxu0 0
        %834 = vmatpush.bf16.msra.mxu0 0
        %835 = vmatpush.bf16.msra.mxu0 0
        %836 = vmatpush.bf16.msra.mxu0 0
        %837 = vmatpush.bf16.msra.mxu0 %v810
        %838 = vmatpush.bf16.msra.mxu0 %v808
        %839 = vmatmul.bf16.gmra.mxu0 %v816
        %v840 = vpop.f32.mrf.mxu0
        %v841 = vadd.f32 0.0, %v840
        %v842 = vpop.f32.mrf.mxu0
        %843 = vdwg.mxu0
        %v844 = vadd.f32 %v787, %v828
        %v845 = vperm.slane %v739, 0
        %v846 = vadd.f32 %v844, %v845
        %v847 = vperm.slane %v742, 0
        %849 = vrot.lane.b32.xlu0 %v847, 32
        %v850 = vpop.permute.xlu0 %849
        %v852 = vadd.f32 %v787, %v850
        %v853 = vperm.slane %v743, 0
        %855 = vrot.lane.b32.xlu0 %v853, 32
        %v856 = vpop.permute.xlu0 %855
        %v858 = vadd.f32 %v828, %v856
        %v859 = vperm.slane %v744, 0
        %861 = vrot.lane.b32.xlu0 %v859, 64
        %v862 = vpop.permute.xlu0 %861
        %v864 = vadd.f32 %v828, %v862
        %v865 = vsel %vm773, %v846, 0.0
        %866 = vadd.xlane.f32.xlu0 %v865
        %v867 = vpop.xlane.xlu0 %866
        %v868 = vrcp.pop 32.0
        %v869 = vmul.f32 32.0, %v868
        %v870 = vsub.f32 1.0, %v869
        %v871 = vmul.f32 %v868, %v870
        %v872 = vadd.f32 %v868, %v871
        %vm873 = vweird.f32 %v868
        %v874 = vsel %vm873, %v868, %v872
        %v875 = vmul.f32 %v867, %v874
        %v876 = vsub.f32 %v846, %v875
        %v877 = vmul.f32 %v876, %v876
        %v878 = vsel %vm773, %v877, 0.0
        %879 = vadd.xlane.f32.xlu0 %v878
        %v880 = vpop.xlane.xlu0 %879
        %v881 = vmul.f32 %v880, %v874
        %v882 = vadd.f32 %v881, 1e-05
        %v883 = vrsqrt.pop %v882
        %v884 = vmul.f32 %v883, %v882
        %v885 = vmul.f32 %v884, %v883
        %v886 = vmul.f32 0.5, %v885
        %v887 = vsub.f32 1.5, %v886
        %v888 = vmul.f32 %v883, %v887
        %vm889 = vweird.f32 %v882
        %vm890 = vweird.f32 %v883
        %vm891 = vmor %vm889, %vm890
        %v892 = vsel %vm891, %v883, %v888
        %v893 = vmul.f32 %v876, %v892
        %v894 = vperm.slane %v740, 0
        %v895 = vmul.f32 %v893, %v894
        %v896 = vperm.slane %v741, 0
        %v897 = vadd.f32 %v895, %v896
        %v898 = vmul.f32 %v897, 0.5
        %v899 = vmul.f32 %v897, 0.044715
        %v900 = vmul.f32 %v899, %v897
        %v901 = vmul.f32 %v900, %v897
        %v902 = vadd.f32 %v897, %v901
        %v903 = vmul.f32 %v902, 0.7978846
        %v904 = vtanh.pop %v903
        %v905 = vadd.f32 %v904, 1.0
        %v906 = vmul.f32 %v898, %v905
        %v907 = vpack.c.bf16 %v906, %v906
        %v908 = vld [vmem:[%s6] sm:$0xf]
        %v909 = vld [vmem:[%s6 + $0x4] sm:$0xf]
        %v910 = vld [vmem:[%s6 + $0x8] sm:$0xf]
        %v911 = vld [vmem:[%s6 + $0xc] sm:$0xf]
        %v912 = vstv %s754
        %v917 = vunpack.c.l.b16 %v908
        %v918 = vunpack.c.l.b16 %v909
        %v919 = vunpack.c.l.b16 %v910
        %v920 = vunpack.c.l.b16 %v911
        %v921 = vpack.c.b16 %v918, %v917
        %v922 = vpack.c.b16 %v920, %v919
        %v926 = vsel %vm773, %v907, 0
        %928 = vmatpush.bf16.msra.mxu0 0
        %929 = vmatpush.bf16.msra.mxu0 0
        %930 = vmatpush.bf16.msra.mxu0 0
        %931 = vmatpush.bf16.msra.mxu0 0
        %932 = vmatpush.bf16.msra.mxu0 0
        %933 = vmatpush.bf16.msra.mxu0 0
        %934 = vmatpush.bf16.msra.mxu0 %v922
        %935 = vmatpush.bf16.msra.mxu0 %v921
        %936 = vmatmul.bf16.gmra.mxu0 %v926
        %v937 = vpop.f32.mrf.mxu0
        %v938 = vadd.f32 %v912, %v937
        %v939 = vpop.f32.mrf.mxu0
        %940 = vdwg.mxu0
        %v941 = vsub.f32 0.0, %v938
        %v942 = vmul.f32 %v941, 1.442695
        %v943 = vpow.pop %v942
        %v944 = vadd.f32 %v943, 1.0
        %v945 = vrcp.pop %v944
        %v946 = vpack.c.bf16 %v852, %v852
        %v947 = vpack.c.bf16 %v858, %v858
        %v948 = vpack.c.bf16 %v864, %v864
        %v950 = vunpack.c.l.b16 %v946
        %v951 = vpack.c.b16 %v950, %v950
        %952 = vrot.lane.b32.xlu0 %v951, 96
        %v953 = vpop.permute.xlu0 %952
        %v955 = vunpack.c.l.b16 %v947
        %v956 = vpack.c.b16 %v955, %v955
        %957 = vrot.lane.b32.xlu0 %v956, 96
        %v958 = vpop.permute.xlu0 %957
        %v960 = vsel %vm773, %v953, 0
        %v963 = vsel %vm773, %v958, 0
        %965 = vmatpush.bf16.xpose.msra.mxu0 0
        %966 = vmatpush.bf16.xpose.msra.mxu0 0
        %967 = vmatpush.bf16.xpose.msra.mxu0 0
        %968 = vmatpush.bf16.xpose.msra.mxu0 0
        %969 = vmatpush.bf16.xpose.msra.mxu0 0
        %970 = vmatpush.bf16.xpose.msra.mxu0 0
        %971 = vmatpush.bf16.xpose.msra.mxu0 0
        %972 = vmatpush.bf16.xpose.msra.mxu0 %v963
        %973 = vmatmul.bf16.gmra.mxu0 %v960
        %v974 = vpop.f32.mrf.mxu0
        %v975 = vadd.f32 0.0, %v974
        %v976 = vpop.f32.mrf.mxu0
        %977 = vdwg.mxu0
        %vm978 = vcmask 64512
        %v979 = vsel %vm978, %v975, -inf
        %980 = vmax.xlane.f32.xlu0 %v979
        %v981 = vpop.xlane.xlu0 %980
        %v982 = vsub.f32 %v975, %v981
        %v983 = vmul.f32 %v982, 1.442695
        %v984 = vpow.pop %v983
        %v985 = vsel %vm978, %v984, 0.0
        %986 = vadd.xlane.f32.xlu0 %v985
        %v987 = vpop.xlane.xlu0 %986
        %v988 = vrcp.pop %v987
        %v989 = vmul.f32 %v984, %v988
        %v990 = vpack.c.bf16 %v989, %v989
        %v992 = vunpack.c.l.b16 %v948
        %v993 = vpack.c.b16 %v992, %v992
        %994 = vrot.lane.b32.xlu0 %v993, 64
        %v995 = vpop.permute.xlu0 %994
        %v997 = vsel %vm978, %v990, 0
        %vm999 = vcmask 1043456
        %v1001 = vsel %vm999, %v995, 0
        %1003 = vmatpush.bf16.msra.mxu0 0
        %1004 = vmatpush.bf16.msra.mxu0 0
        %1005 = vmatpush.bf16.msra.mxu0 0
        %1006 = vmatpush.bf16.msra.mxu0 0
        %1007 = vmatpush.bf16.msra.mxu0 0
        %1008 = vmatpush.bf16.msra.mxu0 0
        %1009 = vmatpush.bf16.msra.mxu0 0
        %1010 = vmatpush.bf16.msra.mxu0 %v1001
        %1011 = vmatmul.bf16.gmra.mxu0 %v997
        %v1012 = vpop.f32.mrf.mxu0
        %v1013 = vadd.f32 0.0, %v1012
        %v1014 = vpop.f32.mrf.mxu0
        %1015 = vdwg.mxu0
        %v1016 = vpack.c.bf16 %v1013, %v1013
        %v1017 = vld [vmem:[#allocation12] sm:$0xf]
        %v1018 = vld [vmem:[#allocation12 + $0x4] sm:$0xf]
        %v1019 = vld [vmem:[#allocation12 + $0x8] sm:$0xf]
        %v1020 = vld [vmem:[#allocation12 + $0xc] sm:$0xf]
        %v1021 = vperm.slane %v745, 0
        %v1026 = vunpack.c.l.b16 %v1017
        %v1027 = vunpack.c.l.b16 %v1018
        %v1028 = vunpack.c.l.b16 %v1019
        %v1029 = vunpack.c.l.b16 %v1020
        %v1030 = vpack.c.b16 %v1027, %v1026
        %v1031 = vpack.c.b16 %v1029, %v1028
        %v1035 = vsel %vm773, %v1016, 0
        %1037 = vmatpush.bf16.msra.mxu0 0
        %1038 = vmatpush.bf16.msra.mxu0 0
        %1039 = vmatpush.bf16.msra.mxu0 0
        %1040 = vmatpush.bf16.msra.mxu0 0
        %1041 = vmatpush.bf16.msra.mxu0 0
        %1042 = vmatpush.bf16.msra.mxu0 0
        %1043 = vmatpush.bf16.msra.mxu0 %v1031
        %1044 = vmatpush.bf16.msra.mxu0 %v1030
        %1045 = vmatmul.bf16.gmra.mxu0 %v1035
        %v1046 = vpop.f32.mrf.mxu0
        %v1047 = vadd.f32 %v1021, %v1046
        %v1048 = vpop.f32.mrf.mxu0
        %1049 = vdwg.mxu0
        %v1050 = vstv %s753
        %v1051 = vmul.f32 %v1050, %v945
        %v1052 = vrcp.pop %v1051
        %1054 = vset.pattern.permute.xlu0 0
        %1055 = vperm.xlu0 %1054, %v1052
        %v1056 = vpop.permute.xlu0 %1055
        %v1058 = vmul.f32 %v1047, %v1056
        %v1059 = vsel %vm773, %v1058, -inf
        %1060 = vmax.xlane.f32.xlu0 %v1059
        %v1061 = vpop.xlane.xlu0 %1060
        %v1062 = vsub.f32 %v1058, %v1061
        %v1063 = vmul.f32 %v1062, 1.442695
        %v1064 = vpow.pop %v1063
        %v1065 = vsel %vm773, %v1064, 0.0
        %1066 = vadd.xlane.f32.xlu0 %v1065
        %v1067 = vpop.xlane.xlu0 %1066
        %v1068 = vrcp.pop %v1067
        %v1069 = vmul.f32 %v1064, %v1068
        %v1070 = vpack.c.bf16 %v1069, %v1069
        %v1071 = vld [vmem:[#allocation10] sm:$0xf]
        %v1072 = vld [vmem:[#allocation10 + $0x4] sm:$0xf]
        %v1073 = vld [vmem:[#allocation10 + $0x8] sm:$0xf]
        %v1074 = vld [vmem:[#allocation10 + $0xc] sm:$0xf]
        %v1079 = vunpack.c.l.b16 %v1071
        %v1080 = vunpack.c.l.b16 %v1072
        %v1081 = vunpack.c.l.b16 %v1073
        %v1082 = vunpack.c.l.b16 %v1074
        %v1083 = vpack.c.b16 %v1080, %v1079
        %v1084 = vpack.c.b16 %v1082, %v1081
        %v1088 = vsel %vm773, %v1070, 0
        %1090 = vmatpush.bf16.msra.mxu0 0
        %1091 = vmatpush.bf16.msra.mxu0 0
        %1092 = vmatpush.bf16.msra.mxu0 0
        %1093 = vmatpush.bf16.msra.mxu0 0
        %1094 = vmatpush.bf16.msra.mxu0 0
        %1095 = vmatpush.bf16.msra.mxu0 0
        %1096 = vmatpush.bf16.msra.mxu0 %v1084
        %1097 = vmatpush.bf16.msra.mxu0 %v1083
        %1098 = vmatmul.bf16.gmra.mxu0 %v1088
        %v1099 = vpop.f32.mrf.mxu0
        %v1100 = vadd.f32 0.0, %v1099
        %v1101 = vpop.f32.mrf.mxu0
        %1102 = vdwg.mxu0
        %1104 = vrot.lane.b32.xlu0 %v787, 64
        %v1105 = vpop.permute.xlu0 %1104
        %v1107 = vadd.f32 %v1100, %v1105
        %1109 = vrot.lane.b32.xlu0 %v828, 32
        %v1110 = vpop.permute.xlu0 %1109
        %v1112 = vadd.f32 %v1107, %v1110
        %v1113 = vperm.slane %v746, 0
        %v1114 = vadd.f32 %v1112, %v1113
        %1116 = vrot.lane.b32.xlu0 %v841, 32
        %v1117 = vpop.permute.xlu0 %1116
        %v1119 = vadd.f32 %v1107, %v1117
        %v1120 = vperm.slane %v747, 0
        %1122 = vrot.lane.b32.xlu0 %v1120, 32
        %v1123 = vpop.permute.xlu0 %1122
        %v1125 = vadd.f32 %v1119, %v1123
        %v1126 = vmul.f32 %v1114, 0.5
        %v1127 = vmul.f32 %v1114, 0.044715
        %v1128 = vmul.f32 %v1127, %v1114
        %v1129 = vmul.f32 %v1128, %v1114
        %v1130 = vadd.f32 %v1114, %v1129
        %v1131 = vmul.f32 %v1130, 0.7978846
        %v1132 = vtanh.pop %v1131
        %v1133 = vadd.f32 %v1132, 1.0
        %v1134 = vmul.f32 %v1126, %v1133
        %v1135 = vpack.c.bf16 %v1134, %v1134
        %v1136 = vld [vmem:[%s8] sm:$0xf]
        %v1137 = vld [vmem:[%s8 + $0x4] sm:$0xf]
        %v1138 = vld [vmem:[%s8 + $0x8] sm:$0xf]
        %v1139 = vld [vmem:[%s8 + $0xc] sm:$0xf]
        %v1140 = vstv %s755
        %v1145 = vunpack.c.l.b16 %v1136
        %v1146 = vunpack.c.l.b16 %v1137
        %v1147 = vunpack.c.l.b16 %v1138
        %v1148 = vunpack.c.l.b16 %v1139
        %v1149 = vpack.c.b16 %v1146, %v1145
        %v1150 = vpack.c.b16 %v1148, %v1147
        %v1154 = vsel %vm773, %v1135, 0
        %1156 = vmatpush.bf16.msra.mxu0 0
        %1157 = vmatpush.bf16.msra.mxu0 0
        %1158 = vmatpush.bf16.msra.mxu0 0
        %1159 = vmatpush.bf16.msra.mxu0 0
        %1160 = vmatpush.bf16.msra.mxu0 0
        %1161 = vmatpush.bf16.msra.mxu0 0
        %1162 = vmatpush.bf16.msra.mxu0 %v1150
        %1163 = vmatpush.bf16.msra.mxu0 %v1149
        %1164 = vmatmul.bf16.gmra.mxu0 %v1154
        %v1165 = vpop.f32.mrf.mxu0
        %v1166 = vadd.f32 %v1140, %v1165
        %v1167 = vpop.f32.mrf.mxu0
        %1168 = vdwg.mxu0
        %v1169 = vsub.f32 0.0, %v1166
        %v1170 = vmul.f32 %v1169, 1.442695
        %v1171 = vpow.pop %v1170
        %v1172 = vadd.f32 %v1171, 1.0
        %v1173 = vrcp.pop %v1172
        %1175 = vrot.lane.b32.xlu0 %v1125, 96
        %v1176 = vpop.permute.xlu0 %1175
        %v1178 = vsel %vm773, %v1176, 0.0
        %1179 = vadd.xlane.f32.xlu0 %v1178
        %v1180 = vpop.xlane.xlu0 %1179
        %v1181 = vmul.f32 %v1180, %v874
        %v1182 = vsub.f32 %v1125, %v1181
        %v1183 = vmul.f32 %v1182, %v1182
        %1185 = vrot.lane.b32.xlu0 %v1183, 96
        %v1186 = vpop.permute.xlu0 %1185
        %v1188 = vsel %vm773, %v1186, 0.0
        %1189 = vadd.xlane.f32.xlu0 %v1188
        %v1190 = vpop.xlane.xlu0 %1189
        %v1191 = vmul.f32 %v1190, %v874
        %v1192 = vadd.f32 %v1191, 1e-05
        %v1193 = vrsqrt.pop %v1192
        %v1194 = vmul.f32 %v1193, %v1192
        %v1195 = vmul.f32 %v1194, %v1193
        %v1196 = vmul.f32 0.5, %v1195
        %v1197 = vsub.f32 1.5, %v1196
        %v1198 = vmul.f32 %v1193, %v1197
        %vm1199 = vweird.f32 %v1192
        %vm1200 = vweird.f32 %v1193
        %vm1201 = vmor %vm1199, %vm1200
        %v1202 = vsel %vm1201, %v1193, %v1198
        %v1203 = vmul.f32 %v1182, %v1202
        %v1204 = vperm.slane %v748, 0
        %1206 = vrot.lane.b32.xlu0 %v1204, 32
        %v1207 = vpop.permute.xlu0 %1206
        %v1209 = vmul.f32 %v1203, %v1207
        %v1210 = vperm.slane %v749, 0
        %1212 = vrot.lane.b32.xlu0 %v1210, 32
        %v1213 = vpop.permute.xlu0 %1212
        %v1215 = vadd.f32 %v1209, %v1213
        %v1216 = vmul.f32 %v1215, 0.5
        %v1217 = vmul.f32 %v1215, 0.044715
        %v1218 = vmul.f32 %v1217, %v1215
        %v1219 = vmul.f32 %v1218, %v1215
        %v1220 = vadd.f32 %v1215, %v1219
        %v1221 = vmul.f32 %v1220, 0.7978846
        %v1222 = vtanh.pop %v1221
        %v1223 = vadd.f32 %v1222, 1.0
        %v1224 = vmul.f32 %v1216, %v1223
        %v1225 = vpack.c.bf16 %v1224, %v1224
        %v1226 = vld [vmem:[#allocation13] sm:$0xf]
        %v1227 = vld [vmem:[#allocation13 + $0x4] sm:$0xf]
        %v1228 = vld [vmem:[#allocation13 + $0x8] sm:$0xf]
        %v1229 = vld [vmem:[#allocation13 + $0xc] sm:$0xf]
        %v1230 = vperm.slane %v750, 0
        %1232 = vrot.lane.b32.xlu0 %v1225, 96
        %v1233 = vpop.permute.xlu0 %1232
        %v1238 = vunpack.c.l.b16 %v1226
        %v1239 = vunpack.c.l.b16 %v1227
        %v1240 = vunpack.c.l.b16 %v1228
        %v1241 = vunpack.c.l.b16 %v1229
        %v1242 = vpack.c.b16 %v1239, %v1238
        %v1243 = vpack.c.b16 %v1241, %v1240
        %v1247 = vsel %vm773, %v1233, 0
        %1249 = vmatpush.bf16.msra.mxu0 0
        %1250 = vmatpush.bf16.msra.mxu0 0
        %1251 = vmatpush.bf16.msra.mxu0 0
        %1252 = vmatpush.bf16.msra.mxu0 0
        %1253 = vmatpush.bf16.msra.mxu0 0
        %1254 = vmatpush.bf16.msra.mxu0 0
        %1255 = vmatpush.bf16.msra.mxu0 %v1243
        %1256 = vmatpush.bf16.msra.mxu0 %v1242
        %1257 = vmatmul.bf16.gmra.mxu0 %v1247
        %v1258 = vpop.f32.mrf.mxu0
        %v1259 = vadd.f32 %v1230, %v1258
        %v1260 = vpop.f32.mrf.mxu0
        %1261 = vdwg.mxu0
        %1263 = vset.pattern.permute.xlu0 0
        %1264 = vperm.xlu0 %1263, %v1173
        %v1265 = vpop.permute.xlu0 %1264
        %v1267 = vmul.f32 %v1265, %v1259
        %v1268 = vadd.f32 %v737, %v1267
        %v1269 = vadd.f32 %v738, %v1267
        %v1270 = vpack.c.bf16 %v1268, %v1268
        %v1271 = vld [vmem:[#allocation15] sm:$0xf]
        %v1272 = vld [vmem:[#allocation15 + $0x4] sm:$0xf]
        %v1273 = vld [vmem:[#allocation15 + $0x8] sm:$0xf]
        %v1274 = vld [vmem:[#allocation15 + $0xc] sm:$0xf]
        %v1275 = vpack.c.bf16 %v1269, %v1269
        %v1276 = vld [vmem:[#allocation16] sm:$0xf]
        %v1277 = vld [vmem:[#allocation16 + $0x4] sm:$0xf]
        %v1278 = vld [vmem:[#allocation16 + $0x8] sm:$0xf]
        %v1279 = vld [vmem:[#allocation16 + $0xc] sm:$0xf]
        %v1284 = vunpack.c.l.b16 %v1276
        %v1285 = vunpack.c.l.b16 %v1277
        %v1286 = vunpack.c.l.b16 %v1278
        %v1287 = vunpack.c.l.b16 %v1279
        %v1288 = vpack.c.b16 %v1285, %v1284
        %v1289 = vpack.c.b16 %v1287, %v1286
        %v1293 = vsel %vm773, %v1275, 0
        %1295 = vmatpush.bf16.msra.mxu0 0
        %1296 = vmatpush.bf16.msra.mxu0 0
        %1297 = vmatpush.bf16.msra.mxu0 0
        %1298 = vmatpush.bf16.msra.mxu0 0
        %1299 = vmatpush.bf16.msra.mxu0 0
        %1300 = vmatpush.bf16.msra.mxu0 0
        %1301 = vmatpush.bf16.msra.mxu0 %v1289
        %1302 = vmatpush.bf16.msra.mxu0 %v1288
        %1303 = vmatmul.bf16.gmra.mxu0 %v1293
        %v1304 = vpop.f32.mrf.mxu0
        %v1305 = vadd.f32 0.0, %v1304
        %v1306 = vpop.f32.mrf.mxu0
        %1307 = vdwg.mxu0
        %v1312 = vunpack.c.l.b16 %v1271
        %v1313 = vunpack.c.l.b16 %v1272
        %v1314 = vunpack.c.l.b16 %v1273
        %v1315 = vunpack.c.l.b16 %v1274
        %v1316 = vpack.c.b16 %v1313, %v1312
        %v1317 = vpack.c.b16 %v1315, %v1314
        %v1321 = vsel %vm773, %v1270, 0
        %1323 = vmatpush.bf16.msra.mxu0 0
        %1324 = vmatpush.bf16.msra.mxu0 0
        %1325 = vmatpush.bf16.msra.mxu0 0
        %1326 = vmatpush.bf16.msra.mxu0 0
        %1327 = vmatpush.bf16.msra.mxu0 0
        %1328 = vmatpush.bf16.msra.mxu0 0
        %1329 = vmatpush.bf16.msra.mxu0 %v1317
        %1330 = vmatpush.bf16.msra.mxu0 %v1316
        %1331 = vmatmul.bf16.gmra.mxu0 %v1321
        %v1332 = vpop.f32.mrf.mxu0
        %v1333 = vadd.f32 %v1305, %v1332
        %v1334 = vpop.f32.mrf.mxu0
        %1335 = vdwg.mxu0
        %v1336 = vperm.slane %v751, 0
        %v1337 = vadd.f32 %v1333, %v1336
        %v1338 = vtanh.pop %v1337
        %v1339 = vperm.slane %v752, 0
        %1341 = vrot.lane.b32.xlu0 %v1339, 32
        %v1342 = vpop.permute.xlu0 %1341
        %v1344 = vadd.f32 %v1333, %v1342
        %v1345 = vtanh.pop %v1344
        %v1346 = vsel %vm773, %v1338, -inf
        %1347 = vmax.xlane.f32.xlu0 %v1346
        %v1348 = vpop.xlane.xlu0 %1347
        %v1349 = vsub.f32 %v1338, %v1348
        %v1350 = vmul.f32 %v1349, 1.442695
        %v1351 = vpow.pop %v1350
        %v1352 = vsel %vm773, %v1351, 0.0
        %1353 = vadd.xlane.f32.xlu0 %v1352
        %v1354 = vpop.xlane.xlu0 %1353
        %v1355 = vrcp.pop %v1354
        %v1356 = vmul.f32 %v1351, %v1355
        %v1357 = vlog2.pop %v1354
        %v1358 = vmul.f32 %v1357, 0.6931472
        %v1359 = vsub.f32 %v1349, %v1358
        %vm1360 = vcmask 523520
        %v1361 = vsel %vm1360, %v1345, -inf
        %1362 = vmax.xlane.f32.xlu0 %v1361
        %v1363 = vpop.xlane.xlu0 %1362
        %v1364 = vsub.f32 %v1345, %v1363
        %v1365 = vmul.f32 %v1364, 1.442695
        %v1366 = vpow.pop %v1365
        %1368 = vrot.lane.b32.xlu0 %v1366, 96
        %v1369 = vpop.permute.xlu0 %1368
        %v1371 = vsel %vm773, %v1369, 0.0
        %1372 = vadd.xlane.f32.xlu0 %v1371
        %v1373 = vpop.xlane.xlu0 %1372
        %v1374 = vrcp.pop %v1373
        %v1375 = vmul.f32 %v1366, %v1374
        %v1376 = vlog2.pop %v1373
        %v1377 = vmul.f32 %v1376, 0.6931472
        %v1378 = vsub.f32 %v1364, %v1377
        %1380 = vrot.lane.b32.xlu0 %v1375, 96
        %v1381 = vpop.permute.xlu0 %1380
        %v1383 = vadd.f32 %v1356, %v1381
        %v1384 = vmul.f32 %v1383, 0.5
        %v1385 = vlog2.pop %v1384
        %v1386 = vmul.f32 %v1385, 0.6931472
        %v1387 = vmul.f32 %v1384, %v1386
        %v1388 = vmul.f32 %v1384, 0.5
        %1390 = vrot.lane.b32.xlu0 %v1378, 96
        %v1391 = vpop.permute.xlu0 %1390
        %v1393 = vadd.f32 %v1359, %v1391
        %v1394 = vmul.f32 %v1388, %v1393
        %v1395 = vsub.f32 %v1387, %v1394
        %v1396 = vsel %vm773, %v1395, 0.0
        %1397 = vadd.xlane.f32.xlu0 %v1396
        %v1398 = vpop.xlane.xlu0 %1397
        %v1399 = vrot.slane %v1398, 4
        %v1400 = vadd.f32 %v1398, %v1399
        %v1401 = vrot.slane %v1400, 2
        %v1402 = vadd.f32 %v1400, %v1401
        %v1403 = vrot.slane %v1402, 1
        %v1404 = vadd.f32 %v1402, %v1403
        %1405 = vst.msk [vmem:[%s710] sm:$0xff] %vm773, %v1338
        %1407 = vrot.lane.b32.xlu0 %v1345, 96
        %v1408 = vpop.permute.xlu0 %1407
        %1410 = vst.msk [vmem:[%s717] sm:$0xff] %vm773, %v1408
        %v1411 = vsub.f32 0.0, %v945
        %v1412 = vmul.f32 %v1411, 1.442695
        %v1413 = vpow.pop %v1412
        %v1414 = vadd.f32 %v1413, 1.0
        %v1415 = vrcp.pop %v1414
        %vm1416 = vcmask 7168
        %1417 = vst.msk [vmem:[%s732] sm:$0xff] %vm1416, %v1415
        %vm1418 = vcmask 0
        %1419 = vst.msk [vmem:[%s735] sm:$0x1] %vm1418, %v1404
        %s1420 = sand.u32 %s335, 1
        %s1421 = scalar_lea.sflag [#allocation4], %s1420
        %s1422 = sand.u32 %s335, 1
        %s1423 = smul.addr %s1422, 8
        %s1424 = scalar_lea.vmem [#allocation19], %s1423
        %s1425 = sand.u32 %s361, 1
        %s1426 = scalar_lea.sflag [#allocation21], %s1425
        %s1427 = sand.u32 %s361, 1
        %s1428 = smul.addr %s1427, 8
        %s1429 = scalar_lea.vmem [#allocation20], %s1428
        %p1430 = scmp.lt.s32.totalorder %s44, 1
        %s1431 = scalar_select %p1430, %s44, 1
        %s1432 = smul.addr %s1431, 8
        %s1433 = scalar_lea.vmem %s15, %s1432
        %p1434 = scmp.lt.s32.totalorder %s44, 1
        %s1435 = scalar_select %p1434, %s44, 1
        %s1436 = scalar_lea.vmem %s16, %s1435
        // Predicated region
        $region113: #{_forward_train.1} parent=71 // pred_check
          %p1437 = pneg %p345
        $region114: #{_forward_train.1} parent=71 // pred_check_branch
          %1439 = sbr.rel (%p1437) target = $region116
        $region115: #{_forward_train.1} parent=71 // pred_region
          %1441 = vsyncadd %s1421, 0
          %s1442 = smul.addr %s44, 8
          %s1443 = scalar_lea.hbm %s13, %s1442
          %s1445 = sshll.u32 %s1424, 4
          %s1446 = int_to_ptr.vmem [resolvable:$true] %s1445
          %s1447 = sshll.u32 %s1443, 4
          %s1448 = int_to_ptr.hbm [resolvable:$true] %s1447
          %1450 = dma.vmem_to_hbm [thread:$0]  %s1446, 128, %s1448, %s1421
        $region116: #{_forward_train.1} parent=71 // pred_fallthru
          _
        // Predicated region
        $region117: #{_forward_train.1} parent=71 // pred_check
          %p1451 = pneg %p371
        $region118: #{_forward_train.1} parent=71 // pred_check_branch
          %1453 = sbr.rel (%p1451) target = $region120
        $region119: #{_forward_train.1} parent=71 // pred_region
          %1455 = vsyncadd %s1426, 0
          %s1456 = smul.addr %s44, 8
          %s1457 = scalar_lea.hbm %s14, %s1456
          %s1459 = sshll.u32 %s1429, 4
          %s1460 = int_to_ptr.vmem [resolvable:$true] %s1459
          %s1461 = sshll.u32 %s1457, 4
          %s1462 = int_to_ptr.hbm [resolvable:$true] %s1461
          %1464 = dma.vmem_to_hbm [thread:$0]  %s1460, 128, %s1462, %s1426
        $region120: #{_forward_train.1} parent=71 // pred_fallthru
          _
        // Predicated region
        $region121: #{_forward_train.1} parent=71 // pred_check
          %p1465 = pneg %p397
        $region122: #{_forward_train.1} parent=71 // pred_check_branch
          %1467 = sbr.rel (%p1465) target = $region124
        $region123: #{_forward_train.1} parent=71 // pred_region
          _
        $region124: #{_forward_train.1} parent=71 // pred_fallthru
          _
        // Predicated region
        $region125: #{_forward_train.1} parent=71 // pred_check
          %p1468 = pneg %p423
        $region126: #{_forward_train.1} parent=71 // pred_check_branch
          %1470 = sbr.rel (%p1468) target = $region128
        $region127: #{_forward_train.1} parent=71 // pred_region
          _
        $region128: #{_forward_train.1} parent=71 // pred_fallthru
          _
      $region72: #{_forward_train.1} parent=5 // pred_fallthru
        _
      %p1471 = scmp.le.s32.totalorder 2, %s39
      // Predicated region
      $region129: #{_forward_train.1} parent=5 // pred_check
        %p1472 = pneg %p1471
      $region130: #{_forward_train.1} parent=5 // pred_check_branch
        %1474 = sbr.rel (%p1472) target = $region132
      $region131: #{_forward_train.1} parent=5 // pred_region
        %s1475 = ssub.s32 %s39, 2
        // Predicated region
        $region133: #{_forward_train.1} parent=131 // pred_check
          %p1476 = pneg %p351
        $region134: #{_forward_train.1} parent=131 // pred_check_branch
          %1478 = sbr.rel (%p1476) target = $region136
        $region135: #{_forward_train.1} parent=131 // pred_region
          %s1479 = sand.u32 %s336, 1
          %s1480 = scalar_lea.sflag [#allocation4], %s1479
          %s1481 = sand.u32 %s336, 1
          %s1482 = smul.addr %s1481, 8
          %s1483 = scalar_lea.vmem [#allocation19], %s1482
          %1485 = dma.done %s1480, 128
        $region136: #{_forward_train.1} parent=131 // pred_fallthru
          _
        // Predicated region
        $region137: #{_forward_train.1} parent=131 // pred_check
          %p1486 = pneg %p377
        $region138: #{_forward_train.1} parent=131 // pred_check_branch
          %1488 = sbr.rel (%p1486) target = $region140
        $region139: #{_forward_train.1} parent=131 // pred_region
          %s1489 = sand.u32 %s362, 1
          %s1490 = scalar_lea.sflag [#allocation21], %s1489
          %s1491 = sand.u32 %s362, 1
          %s1492 = smul.addr %s1491, 8
          %s1493 = scalar_lea.vmem [#allocation20], %s1492
          %1495 = dma.done %s1490, 128
        $region140: #{_forward_train.1} parent=131 // pred_fallthru
          _
        // Predicated region
        $region141: #{_forward_train.1} parent=131 // pred_check
          %p1496 = pneg %p403
        $region142: #{_forward_train.1} parent=131 // pred_check_branch
          %1498 = sbr.rel (%p1496) target = $region144
        $region143: #{_forward_train.1} parent=131 // pred_region
          %p1499 = scmp.lt.s32.totalorder %s45, 1
          %s1500 = scalar_select %p1499, %s45, 1
          %s1501 = smul.addr %s1500, 8
          %s1502 = scalar_lea.vmem %s15, %s1501
        $region144: #{_forward_train.1} parent=131 // pred_fallthru
          _
        // Predicated region
        $region145: #{_forward_train.1} parent=131 // pred_check
          %p1503 = pneg %p429
        $region146: #{_forward_train.1} parent=131 // pred_check_branch
          %1505 = sbr.rel (%p1503) target = $region148
        $region147: #{_forward_train.1} parent=131 // pred_region
          %p1506 = scmp.lt.s32.totalorder %s45, 1
          %s1507 = scalar_select %p1506, %s45, 1
          %s1508 = scalar_lea.vmem %s16, %s1507
        $region148: #{_forward_train.1} parent=131 // pred_fallthru
          _
      $region132: #{_forward_train.1} parent=5 // pred_fallthru
        _
    $region6: #{_forward_train.1} parent=1 // loop_footer
      %s43 = sadd.s32 1, %s39
    $region7: #{_forward_train.1} parent=1 // loop_footer_branch
      %38 = sbr.rel target = $region3
    $region8: #{_forward_train.1} parent=1 // loop_exit
      _
    %1509 = vsyncpa [#allocation3], 1
    %s1510 = scalar_lea.sflag [#allocation3], 1
    %1511 = vsyncpa %s1510, 1
    %1512 = vsyncpa [#allocation8], 1
    %s1513 = scalar_lea.sflag [#allocation8], 1
    %1514 = vsyncpa %s1513, 1
    %1515 = vsyncpa [#allocation11], 1
    %1516 = vsyncpa [#allocation14], 1
    %1517 = vsyncpa [#allocation17], 1
    %1518 = vsyncpa [#allocation4], 1
    %s1519 = scalar_lea.sflag [#allocation4], 1
    %1520 = vsyncpa %s1519, 1
    %1521 = vsyncpa [#allocation21], 1
    %s1522 = scalar_lea.sflag [#allocation21], 1
    %1523 = vsyncpa %s1522, 1
    %1524 = vsyncpa [#allocation5], 1
    %s1525 = scalar_lea.sflag [#allocation5], 1
    %1526 = vsyncpa %s1525, 1

</llo_original>
